<compile_context>
chip_gen: v7x
topology: tpu7x:2x2x1
jax: 0.10.0
libtpu: 0.0.40
codegen_flags: <defaults>
</compile_context>

<pallas_src>
import functools

import jax
import jax.numpy as jnp
import numpy as np
from jax.experimental import pallas as pl
from jax.experimental.pallas import tpu as pltpu

K = 7                     # SpatialGate kernel size
PAD = (K - 1) // 2        # = 3, "same" padding
KK = K * K


# --------------------------------------------------------------------------------------------
# Kernels
# --------------------------------------------------------------------------------------------
def _spatial_gate_mxu_kernel(x_ref, m_ref, bias_ref, o_ref):
    """x_ref/o_ref: (Bt, C, HWp) VMEM; m_ref: (2, HWp, HWp) VMEM; bias_ref: (1,) SMEM."""
    x_in = x_ref[...]                               # (Bt, C, HWp), native dtype
    xf = x_in.astype(jnp.float32)

    # ChannelPool: max & mean over channels -> two lane-dense (Bt, HWp) maps (torch.cat order).
    x_max = jnp.max(xf, axis=1)
    x_mean = jnp.mean(xf, axis=1)

    # 7x7 conv (+ folded BN scale) as one MXU matmul per pooled map; f32 accumulation at
    # HIGHEST precision keeps the result well inside the 2e-5 tolerance.
    acc = (jnp.dot(x_max, m_ref[0], preferred_element_type=jnp.float32,
                   precision=jax.lax.Precision.HIGHEST)
           + jnp.dot(x_mean, m_ref[1], preferred_element_type=jnp.float32,
                     precision=jax.lax.Precision.HIGHEST)
           + bias_ref[0])

    # Sigmoid via tanh (EUP slot), broadcast over channels, multiply in the input dtype.
    gate = 0.5 * (jnp.tanh(0.5 * acc) + 1.0)        # (Bt, HWp)
    o_ref[...] = (x_in * gate.astype(x_in.dtype)[:, None, :]).astype(o_ref.dtype)


def _spatial_gate_roll_kernel(x_ref, wtab_ref, bias_ref, o_ref, *, W, HWp):
    """Fallback for very large spatial maps: 98 static lane-rolls against a (2*KK, HWp) table."""
    x_in = x_ref[...]                               # (Bt, C, HWp)
    xf = x_in.astype(jnp.float32)
    x_max = jnp.max(xf, axis=1)
    x_mean = jnp.mean(xf, axis=1)
    pooled = (x_max, x_mean)

    acc = jnp.full_like(x_max, bias_ref[0])
    for c in range(2):
        p = pooled[c]
        for kh in range(K):
            for kw in range(K):
                s = (kh - PAD) * W + (kw - PAD)     # flattened spatial offset of this tap
                shifted = p if s == 0 else pltpu.roll(p, shift=(-s) % HWp, axis=1)
                wrow = wtab_ref[pl.ds(c * KK + kh * K + kw, 1), :]   # (1, HWp)
                acc = acc + shifted * wrow

    gate = 0.5 * (jnp.tanh(0.5 * acc) + 1.0)
    o_ref[...] = (x_in * gate.astype(x_in.dtype)[:, None, :]).astype(o_ref.dtype)


# --------------------------------------------------------------------------------------------
# Wrapper helpers
# --------------------------------------------------------------------------------------------
def _vmem_budgets():
    """(per-x-block byte budget, vmem_limit_bytes) based on physical VMEM of this generation."""
    cap = 64 * 1024 * 1024
    try:
        cap = getattr(pltpu.get_tpu_info(), "vmem_capacity_bytes", cap)
    except Exception:
        pass
    if cap <= 64 * 1024 * 1024:                         # v7x-class: 64 MiB per core
        return 6 * 1024 * 1024, 48 * 1024 * 1024
    return 14 * 1024 * 1024, 80 * 1024 * 1024           # v5e / v6e: 128 MiB


def _pick_batch_tile(B, bytes_per_batch, budget):
    """Largest divisor of B whose x-block fits the budget, while keeping >= 2 grid steps
    (megacore sharding on v7x + prefetch/compute overlap) whenever B >= 2."""
    bt = max(1, min(B, budget // max(bytes_per_batch, 1)))
    if B >= 2:
        bt = min(bt, max(1, B // 2))
    while B % bt:
        bt -= 1
    return bt


def _build_conv_matrix(conv_w, bn_scale, H, W, HWp):
    """(2, HWp, HWp) f32: M[c, src, dst] = conv_w[0,c,kh,kw]*bn_scale for every valid tap
    mapping flat input position src to flat output position dst (zero-padded conv)."""
    ho, wo = np.meshgrid(np.arange(H), np.arange(W), indexing="ij")
    dst = (ho * W + wo).reshape(-1)
    rows, cols, taps = [], [], []
    for c in range(2):
        for kh in range(K):
            for kw in range(K):
                hi = ho + kh - PAD
                wi = wo + kw - PAD
                valid = ((hi >= 0) & (hi < H) & (wi >= 0) & (wi < W)).reshape(-1)
                src = (hi * W + wi).reshape(-1)
                rows.append(c * HWp + src[valid])
                cols.append(dst[valid])
                taps.append(np.full(int(valid.sum()), c * KK + kh * K + kw, np.int32))
    rows = np.concatenate(rows)
    cols = np.concatenate(cols)
    taps = np.concatenate(taps)
    wflat = conv_w.astype(jnp.float32).reshape(2 * KK) * bn_scale       # (98,), BN scale folded
    m = jnp.zeros((2 * HWp, HWp), jnp.float32).at[rows, cols].add(wflat[taps])
    return m.reshape(2, HWp, HWp)


def _build_conv_table(conv_w, bn_scale, H, W, HWp):
    """(2*KK, HWp) f32 per-tap weight rows (weight * pad-validity * BN scale) for the roll path."""
    HW = H * W
    hh = jnp.arange(H).reshape(1, 1, H, 1)
    ww = jnp.arange(W).reshape(1, 1, 1, W)
    dh = (jnp.arange(K) - PAD).reshape(K, 1, 1, 1)
    dw = (jnp.arange(K) - PAD).reshape(1, K, 1, 1)
    valid = ((hh + dh >= 0) & (hh + dh < H) &
             (ww + dw >= 0) & (ww + dw < W)).astype(jnp.float32)        # (K, K, H, W)
    wtab = conv_w.astype(jnp.float32)[0][:, :, :, None, None] * valid[None]   # (2, K, K, H, W)
    wtab = (wtab * bn_scale[0]).reshape(2 * KK, HW)
    if HWp != HW:
        wtab = jnp.pad(wtab, ((0, 0), (0, HWp - HW)))
    return wtab


# --------------------------------------------------------------------------------------------
# Public entry point
# --------------------------------------------------------------------------------------------
def spatial_gate(x, conv_w, bn_gamma, bn_beta, bn_mean, bn_var, eps=1e-5):
    """x: (B, C, H, W) NCHW. conv_w: (1, 2, K, K) PyTorch OIHW. BN params: shape (1,)."""
    B, C, H, W = x.shape
    HW = H * W
    HWp = ((HW + 127) // 128) * 128                 # lane-dense padding of the flat spatial dim

    bn_scale = (bn_gamma / jnp.sqrt(bn_var + eps)).astype(jnp.float32)  # (1,)
    bn_bias = (bn_beta - bn_mean * bn_scale).astype(jnp.float32)        # (1,)

    x_flat = x.reshape(B, C, HW)
    if HWp != HW:
        x_flat = jnp.pad(x_flat, ((0, 0), (0, 0), (0, HWp - HW)))

    block_budget, vmem_limit = _vmem_budgets()
    bytes_per_batch = C * HWp * x.dtype.itemsize
    bt = _pick_batch_tile(B, bytes_per_batch, block_budget)

    # Use the MXU matmul path whenever the folded conv matrix is small enough to stay resident.
    use_mxu = 2 * HWp * HWp * 4 <= 8 * 1024 * 1024
    const_bytes = (2 * HWp * HWp * 4) if use_mxu else (2 * KK * HWp * 4)
    # in + out blocks are double-buffered; the constant-indexed table may be too.
    assert 4 * bt * bytes_per_batch + 2 * const_bytes <= vmem_limit, (
        "SpatialGate block does not fit VMEM; add a channel/spatial tiling path")

    if use_mxu:
        kernel = _spatial_gate_mxu_kernel
        tbl = _build_conv_matrix(conv_w, bn_scale, H, W, HWp)
        tbl_spec = pl.BlockSpec((2, HWp, HWp), lambda b: (0, 0, 0))     # resident constant
    else:
        kernel = functools.partial(_spatial_gate_roll_kernel, W=W, HWp=HWp)
        tbl = _build_conv_table(conv_w, bn_scale, H, W, HWp)
        tbl_spec = pl.BlockSpec((2 * KK, HWp), lambda b: (0, 0))        # resident constant

    out_flat = pl.pallas_call(
        kernel,
        out_shape=jax.ShapeDtypeStruct((B, C, HWp), x.dtype),
        grid=(B // bt,),
        in_specs=[
            pl.BlockSpec((bt, C, HWp), lambda b: (b, 0, 0)),
            tbl_spec,
            pl.BlockSpec(memory_space=pltpu.MemorySpace.SMEM),          # folded BN bias scalar
        ],
        out_specs=pl.BlockSpec((bt, C, HWp), lambda b: (b, 0, 0)),
        compiler_params=pltpu.CompilerParams(
            dimension_semantics=("parallel",),
            vmem_limit_bytes=vmem_limit,
        ),
    )(x_flat, tbl, bn_bias)

    out_flat = out_flat[:, :, :HW] if HWp != HW else out_flat
    return out_flat.reshape(B, C, H, W)


# --------------------------------------------------------------------------------------------
if __name__ == "__main__":
    key = jax.random.PRNGKey(0)
    kx, kw = jax.random.split(key)
    B, C, H, W = 2, 4, 16, 16

    x = jax.random.normal(kx, (B, C, H, W), jnp.float32)
    # Deterministic synthetic parameters (shapes from SpatialGate.__init__):
    conv_w = jax.random.normal(kw, (1, 2, K, K), jnp.float32) * 0.1   # Conv2d(2,1,7), bias=False
    bn_gamma = jnp.ones((1,), jnp.float32)    # BatchNorm2d(1) affine defaults
    bn_beta = jnp.zeros((1,), jnp.float32)
    bn_mean = jnp.zeros((1,), jnp.float32)    # running stats (eval mode)
    bn_var = jnp.ones((1,), jnp.float32)

    out = jax.block_until_ready(
        spatial_gate(x, conv_w, bn_gamma, bn_beta, bn_mean, bn_var))

    # ---- float64 NumPy reference of the eval-mode PyTorch forward (exact ground truth) ----
    eps = 1e-5
    xn = np.asarray(x, np.float64)
    wn = np.asarray(conv_w, np.float64)
    pooled = np.stack([xn.max(axis=1), xn.mean(axis=1)], axis=1)          # (B, 2, H, W)
    padded = np.pad(pooled, ((0, 0), (0, 0), (PAD, PAD), (PAD, PAD)))
    conv = np.zeros((B, H, W), np.float64)
    for c in range(2):
        for kh in range(K):
            for kw_ in range(K):
                conv += wn[0, c, kh, kw_] * padded[:, c, kh:kh + H, kw_:kw_ + W]
    scale = np.asarray(bn_gamma, np.float64) / np.sqrt(np.asarray(bn_var, np.float64) + eps)
    bias = np.asarray(bn_beta, np.float64) - np.asarray(bn_mean, np.float64) * scale
    y = conv * scale[0] + bias[0]
    ref = xn * (1.0 / (1.0 + np.exp(-y)))[:, None, :, :]

    np.testing.assert_allclose(np.asarray(out, np.float64), ref, rtol=2e-5, atol=2e-5)
    print("KERNEL_OK")
</pallas_src>

<mosaic_0001>
module attributes {stable_mosaic.version = 11 : i64} {
  func.func @_spatial_gate_mxu_kernel(%arg0: i32, %arg1: memref<1x4x256xf32, #tpu.memory_space<vmem>>, %arg2: memref<2x256x256xf32, #tpu.memory_space<vmem>>, %arg3: memref<1xf32, #tpu.memory_space<smem>>, %arg4: memref<1x4x256xf32, #tpu.memory_space<vmem>>) attributes {dimension_semantics = [#tpu.dimension_semantics<parallel>], iteration_bounds = array<i64: 2>, scalar_prefetch = 0 : i64, scratch_operands = 0 : i64, tpu.core_type = #tpu.core_type<tc>, window_params = [{transform_indices = @transform_0, window_bounds = array<i64: 1, 4, 256>}, {pipeline_mode = #tpu.pipeline_mode<synchronous>, transform_indices = @transform_1, window_bounds = array<i64: 2, 256, 256>}, {transform_indices = @transform_2, window_bounds = array<i64: 1>}, {transform_indices = @transform_3, window_bounds = array<i64: 1, 4, 256>}]} {
    %c0 = arith.constant 0 : index
    %c0_0 = arith.constant 0 : index
    %c0_1 = arith.constant 0 : index
    %0 = vector.load %arg1[%c0, %c0_0, %c0_1] : memref<1x4x256xf32, #tpu.memory_space<vmem>>, vector<1x4x256xf32>
    %cst = arith.constant dense<0xFF800000> : vector<1x256xf32>
    %1 = vector.multi_reduction <maximumf>, %0, %cst [1] : vector<1x4x256xf32> to vector<1x256xf32>
    %cst_2 = arith.constant dense<0.000000e+00> : vector<1x256xf32>
    %2 = vector.multi_reduction <add>, %0, %cst_2 [1] : vector<1x4x256xf32> to vector<1x256xf32>
    %cst_3 = arith.constant 4.000000e+00 : f32
    %3 = vector.broadcast %cst_3 : f32 to vector<1x256xf32>
    %4 = arith.divf %2, %3 : vector<1x256xf32>
    %c0_4 = arith.constant 0 : index
    %c0_5 = arith.constant 0 : index
    %c0_6 = arith.constant 0 : index
    %5 = vector.load %arg2[%c0_4, %c0_5, %c0_6] : memref<2x256x256xf32, #tpu.memory_space<vmem>>, vector<1x256x256xf32>
    %6 = vector.shape_cast %5 : vector<1x256x256xf32> to vector<256x256xf32>
    %cst_7 = arith.constant dense<0.000000e+00> : vector<1x256xf32>
    %7 = tpu.matmul %1, %6, %cst_7 {dimension_numbers = #tpu.dot_dimension_numbers<[1], [0], [0], [1], [0, 0, 1, 1], [], []>, precision = #tpu.contract_precision<fp32>} : vector<1x256xf32>, vector<256x256xf32>, vector<1x256xf32> -> vector<1x256xf32>
    %c1 = arith.constant 1 : index
    %c0_8 = arith.constant 0 : index
    %c0_9 = arith.constant 0 : index
    %8 = vector.load %arg2[%c1, %c0_8, %c0_9] : memref<2x256x256xf32, #tpu.memory_space<vmem>>, vector<1x256x256xf32>
    %9 = vector.shape_cast %8 : vector<1x256x256xf32> to vector<256x256xf32>
    %cst_10 = arith.constant dense<0.000000e+00> : vector<1x256xf32>
    %10 = tpu.matmul %4, %9, %cst_10 {dimension_numbers = #tpu.dot_dimension_numbers<[1], [0], [0], [1], [0, 0, 1, 1], [], []>, precision = #tpu.contract_precision<fp32>} : vector<1x256xf32>, vector<256x256xf32>, vector<1x256xf32> -> vector<1x256xf32>
    %11 = arith.addf %7, %10 : vector<1x256xf32>
    %c0_11 = arith.constant 0 : index
    %12 = memref.load %arg3[%c0_11] : memref<1xf32, #tpu.memory_space<smem>>
    %13 = vector.broadcast %12 : f32 to vector<1x256xf32>
    %14 = arith.addf %11, %13 : vector<1x256xf32>
    %cst_12 = arith.constant 5.000000e-01 : f32
    %15 = vector.broadcast %cst_12 : f32 to vector<1x256xf32>
    %16 = arith.mulf %15, %14 : vector<1x256xf32>
    %17 = math.tanh %16 : vector<1x256xf32>
    %cst_13 = arith.constant 1.000000e+00 : f32
    %18 = vector.broadcast %cst_13 : f32 to vector<1x256xf32>
    %19 = arith.addf %17, %18 : vector<1x256xf32>
    %cst_14 = arith.constant 5.000000e-01 : f32
    %20 = vector.broadcast %cst_14 : f32 to vector<1x256xf32>
    %21 = arith.mulf %20, %19 : vector<1x256xf32>
    %22 = vector.shape_cast %21 : vector<1x256xf32> to vector<1x1x256xf32>
    %23 = vector.broadcast %22 : vector<1x1x256xf32> to vector<1x4x256xf32>
    %24 = arith.mulf %0, %23 : vector<1x4x256xf32>
    %c0_15 = arith.constant 0 : index
    %c0_16 = arith.constant 0 : index
    %c0_17 = arith.constant 0 : index
    %25 = vector.load %arg4[%c0_15, %c0_16, %c0_17] : memref<1x4x256xf32, #tpu.memory_space<vmem>>, vector<1x4x256xf32>
    tpu.vector_store %arg4[%c0_15, %c0_16, %c0_17], %24 {strides = array<i32>} : memref<1x4x256xf32, #tpu.memory_space<vmem>>, vector<1x4x256xf32>,
    return
  }
  func.func @transform_0(%arg0: i32) -> (i32, i32, i32) {
    %c0_i32 = arith.constant 0 : i32
    %c0_i32_0 = arith.constant 0 : i32
    %c0_i32_1 = arith.constant 0 : i32
    return %arg0, %c0_i32, %c0_i32_0 : i32, i32, i32
  }
  func.func @transform_1(%arg0: i32) -> (i32, i32, i32) {
    %c0_i32 = arith.constant 0 : i32
    %c0_i32_0 = arith.constant 0 : i32
    %c0_i32_1 = arith.constant 0 : i32
    %c0_i32_2 = arith.constant 0 : i32
    return %c0_i32, %c0_i32_0, %c0_i32_1 : i32, i32, i32
  }
  func.func @transform_2(%arg0: i32) -> i32 {
    %c0_i32 = arith.constant 0 : i32
    %c0_i32_0 = arith.constant 0 : i32
    return %c0_i32 : i32
  }
  func.func @transform_3(%arg0: i32) -> (i32, i32, i32) {
    %c0_i32 = arith.constant 0 : i32
    %c0_i32_0 = arith.constant 0 : i32
    %c0_i32_1 = arith.constant 0 : i32
    return %arg0, %c0_i32, %c0_i32_0 : i32, i32, i32
  }
}

</mosaic_0001>

<llo_original>
// kernel: tpu_custom_call.1
$region0: #{tpu_custom_call.1}
  #allocation0 [shape = 'u32[]', space=smem, size = 0x4, offset = 0x4, fixed_abs, tag = 'smem constant byte address 0x4 - core index']
  #allocation1 [shape = 'u32[144,128]{1,0:T(1,128)}', space=vmem, size = 0x12000, scoped, tag = 'internal scratch']
  #allocation2 [shape = 'f32[1]{0:T(128)S(6)}', space=smem, size = 0x200, scoped, tag = 'scoped memory for tpu_custom_call.1']
  %s0 = inlined_call_operand.hbm [shape: f32[2,4,256], index: 0, kind: input, shape index: {}]
  %s1 = inlined_call_operand.hbm [shape: f32[2,256,256], index: 1, kind: input, shape index: {}]
  %s2 = inlined_call_operand.<no memory space> [shape: f32[1], index: 2, kind: input, shape index: {}]
  %s3 = inlined_call_operand.hbm [shape: f32[2,4,256], index: 3, kind: output, shape index: {}]
  %s4 = sld [smem:[#allocation0]]
  $region53: #{tpu_custom_call.1} parent=0
    _
  %s6 = ssub.s32 1, %s4
  %s7 = scalar_select 0, %s6, %s4
  %8 = sst [smem:[#allocation2]] %s2
  $region1: #{tpu_custom_call.1} parent=0
    #allocation3 [shape = 'u8[8192]{0}', space=vmem, size = 0x2000, scoped, tag = 'input window, operand 0']
    #allocation4 [shape = 's32[2]{0}', space=sflag, size = 0x8, scoped, tag = 'scoped memory for tpu_custom_call.1']
    #allocation5 [shape = 's32[2]{0}', space=sflag, size = 0x8, scoped, tag = 'scoped memory for tpu_custom_call.1']
    #allocation6 [shape = 'u8[524288]{0}', space=vmem, size = 0x80000, scoped, tag = 'input window, operand 1, single buffered']
    #allocation7 [shape = 's32[1]{0}', space=sflag, size = 0x4, scoped, tag = 'scoped memory for tpu_custom_call.1']
    #allocation8 [shape = 'u8[8192]{0}', space=vmem, size = 0x2000, scoped, tag = 'output window, operand 0']
    %9 = vsyncpa [#allocation4], 0
    %s10 = scalar_lea.sflag [#allocation4], 1
    %11 = vsyncpa %s10, 0
    %12 = vsyncpa [#allocation7], 0
    %13 = vsyncpa [#allocation5], 0
    %s14 = scalar_lea.sflag [#allocation5], 1
    %15 = vsyncpa %s14, 0
    loop: start=0, step=1, limit=4
    $region2: #{tpu_custom_call.1} parent=1 // loop_pre_header
      _
    $region3: #{tpu_custom_call.1} parent=1 // loop_header
      %s17 = sphi 0, %s21
      %p18 = scmp.ge.s32.totalorder %s17, 4
      %s27 = sphi 0, %s29
      %s30 = sphi 0, %s27
      %s31 = sphi 0, %s30
      %s47 = sphi 0, %s31
      %s51 = sphi 0, %s51
      %s53 = sphi 0, %s51
      %s54 = sphi 0, %s53
      %s68 = sphi 0, %s54
      %s72 = sphi 0, %s72
      %s74 = sphi 0, %s72
      %s75 = sphi 0, %s74
      %s89 = sphi 0, %s75
      %s95 = sphi 0, %s97
      %s98 = sphi 0, %s95
      %s99 = sphi 0, %s98
      %s115 = sphi 0, %s99
    $region4: #{tpu_custom_call.1} parent=1 // loop_header_branch
      %20 = sbr.rel (%p18) target = $region8
    $region5: #{tpu_custom_call.1} parent=1 // loop_body
      %s22 = ssub.s32 %s17, 1
      %s23 = ssub.s32 %s17, 2
      %s24 = sadd.s32 %s17, 1
      %s25 = ssub.s32 %s17, %s24
      %p26 = scmp.eq.s32.totalorder %s25, 0
      %s28 = sadd.s32 %s27, 1
      %s29 = scalar_select %p26, %s27, %s28
      %p32 = pneg %p26
      %p33 = scmp.eq.s32.totalorder %s17, 1
      %p34 = por %p32, %p33
      %p35 = scmp.ne.s32.totalorder %s27, %s30
      %p36 = scmp.eq.s32.totalorder %s17, 0
      %p37 = por %p35, %p36
      %p38 = scmp.ne.s32.totalorder %s27, %s30
      %p39 = scmp.eq.s32.totalorder %s22, 1
      %p40 = por %p38, %p39
      %p41 = scmp.ne.s32.totalorder %s30, %s31
      %p42 = scmp.eq.s32.totalorder %s22, 0
      %p43 = por %p41, %p42
      %p44 = scmp.ne.s32.totalorder %s30, %s31
      %p45 = scmp.eq.s32.totalorder %s23, 1
      %p46 = por %p44, %p45
      %p48 = scmp.ne.s32.totalorder %s31, %s47
      %p49 = scmp.eq.s32.totalorder %s23, 0
      %p50 = por %p48, %p49
      %s52 = sadd.s32 %s51, 1
      %p55 = scmp.eq.s32.totalorder %s17, 1
      %p56 = scmp.ne.s32.totalorder %s51, %s53
      %p57 = scmp.eq.s32.totalorder %s17, 0
      %p58 = por %p56, %p57
      %p59 = scmp.ne.s32.totalorder %s51, %s53
      %p60 = scmp.eq.s32.totalorder %s22, 1
      %p61 = por %p59, %p60
      %p62 = scmp.ne.s32.totalorder %s53, %s54
      %p63 = scmp.eq.s32.totalorder %s22, 0
      %p64 = por %p62, %p63
      %p65 = scmp.ne.s32.totalorder %s53, %s54
      %p66 = scmp.eq.s32.totalorder %s23, 1
      %p67 = por %p65, %p66
      %p69 = scmp.ne.s32.totalorder %s54, %s68
      %p70 = scmp.eq.s32.totalorder %s23, 0
      %p71 = por %p69, %p70
      %s73 = sadd.s32 %s72, 1
      %p76 = scmp.eq.s32.totalorder %s17, 1
      %p77 = scmp.ne.s32.totalorder %s72, %s74
      %p78 = scmp.eq.s32.totalorder %s17, 0
      %p79 = por %p77, %p78
      %p80 = scmp.ne.s32.totalorder %s72, %s74
      %p81 = scmp.eq.s32.totalorder %s22, 1
      %p82 = por %p80, %p81
      %p83 = scmp.ne.s32.totalorder %s74, %s75
      %p84 = scmp.eq.s32.totalorder %s22, 0
      %p85 = por %p83, %p84
      %p86 = scmp.ne.s32.totalorder %s74, %s75
      %p87 = scmp.eq.s32.totalorder %s23, 1
      %p88 = por %p86, %p87
      %p90 = scmp.ne.s32.totalorder %s75, %s89
      %p91 = scmp.eq.s32.totalorder %s23, 0
      %p92 = por %p90, %p91
      %s93 = ssub.s32 %s17, %s24
      %p94 = scmp.eq.s32.totalorder %s93, 0
      %s96 = sadd.s32 %s95, 1
      %s97 = scalar_select %p94, %s95, %s96
      %p100 = pneg %p94
      %p101 = scmp.eq.s32.totalorder %s17, 1
      %p102 = por %p100, %p101
      %p103 = scmp.ne.s32.totalorder %s95, %s98
      %p104 = scmp.eq.s32.totalorder %s17, 0
      %p105 = por %p103, %p104
      %p106 = scmp.ne.s32.totalorder %s95, %s98
      %p107 = scmp.eq.s32.totalorder %s22, 1
      %p108 = por %p106, %p107
      %p109 = scmp.ne.s32.totalorder %s98, %s99
      %p110 = scmp.eq.s32.totalorder %s22, 0
      %p111 = por %p109, %p110
      %p112 = scmp.ne.s32.totalorder %s98, %s99
      %p113 = scmp.eq.s32.totalorder %s23, 1
      %p114 = por %p112, %p113
      %p116 = scmp.ne.s32.totalorder %s99, %s115
      %p117 = scmp.eq.s32.totalorder %s23, 0
      %p118 = por %p116, %p117
      %p119 = scmp.le.s32.totalorder 1, %s17
      %p120 = scmp.lt.s32.totalorder %s17, 3
      %p121 = pnand %p119, %p120
      %p122 = pneg %p121
      // Predicated region
      $region9: #{tpu_custom_call.1} parent=5 // pred_check
        _
      $region10: #{tpu_custom_call.1} parent=5 // pred_check_branch
        %124 = sbr.rel (%p121) target = $region12
      $region11: #{tpu_custom_call.1} parent=5 // pred_region
        %s125 = ssub.s32 %s17, 1
        // Predicated region
        $region13: #{tpu_custom_call.1} parent=11 // pred_check
          %p126 = pneg %p64
        $region14: #{tpu_custom_call.1} parent=11 // pred_check_branch
          %128 = sbr.rel (%p126) target = $region16
        $region15: #{tpu_custom_call.1} parent=11 // pred_region
          %s130 = ssub.s32 16384, 16384
          %131 = vsyncadd [#allocation7], %s130
          %s132 = sshll.u32 [#allocation6], 4
          %s133 = int_to_ptr.vmem [resolvable:$true] %s132
          %138 = dma.hbm_to_vmem [thread:$0]  %s1, 16384, %s133, [#allocation7], 256, 256, 16
        $region16: #{tpu_custom_call.1} parent=11 // pred_fallthru
          _
        // Predicated region
        $region17: #{tpu_custom_call.1} parent=11 // pred_check
          %p139 = pneg %p85
        $region18: #{tpu_custom_call.1} parent=11 // pred_check_branch
          %141 = sbr.rel (%p139) target = $region20
        $region19: #{tpu_custom_call.1} parent=11 // pred_region
          _
        $region20: #{tpu_custom_call.1} parent=11 // pred_fallthru
          _
      $region12: #{tpu_custom_call.1} parent=5 // pred_fallthru
        _
      %p142 = scmp.lt.s32.totalorder %s17, 2
      // Predicated region
      $region21: #{tpu_custom_call.1} parent=5 // pred_check
        %p143 = pneg %p142
      $region22: #{tpu_custom_call.1} parent=5 // pred_check_branch
        %145 = sbr.rel (%p143) target = $region24
      $region23: #{tpu_custom_call.1} parent=5 // pred_region
        // Predicated region
        $region25: #{tpu_custom_call.1} parent=23 // pred_check
          %p146 = pneg %p37
        $region26: #{tpu_custom_call.1} parent=23 // pred_check_branch
          %148 = sbr.rel (%p146) target = $region28
        $region27: #{tpu_custom_call.1} parent=23 // pred_region
          %s149 = sand.u32 %s27, 1
          %s150 = scalar_lea.sflag [#allocation4], %s149
          %s151 = sand.u32 %s27, 1
          %s152 = smul.addr %s151, 8
          %s153 = scalar_lea.vmem [#allocation3], %s152
          %s155 = ssub.s32 128, 128
          %156 = vsyncadd %s150, %s155
          %s157 = smul.addr %s17, 2
          %s158 = smul.addr %s157, 64
          %s159 = scalar_lea.hbm %s0, %s158
          %s161 = sshll.u32 %s153, 4
          %s162 = int_to_ptr.vmem [resolvable:$true] %s161
          %164 = dma.hbm_to_vmem [thread:$0]  %s159, 128, %s162, %s150
        $region28: #{tpu_custom_call.1} parent=23 // pred_fallthru
          _
      $region24: #{tpu_custom_call.1} parent=5 // pred_fallthru
        _
      %p165 = scmp.le.s32.totalorder 1, %s17
      %p166 = scmp.lt.s32.totalorder %s17, 3
      %p167 = pnand %p165, %p166
      %p168 = pneg %p167
      // Predicated region
      $region29: #{tpu_custom_call.1} parent=5 // pred_check
        _
      $region30: #{tpu_custom_call.1} parent=5 // pred_check_branch
        %170 = sbr.rel (%p167) target = $region32
      $region31: #{tpu_custom_call.1} parent=5 // pred_region
        %s171 = ssub.s32 %s17, 1
        %s172 = sand.u32 %s30, 1
        %s173 = scalar_lea.sflag [#allocation4], %s172
        %s174 = sand.u32 %s30, 1
        %s175 = smul.addr %s174, 8
        %s176 = scalar_lea.vmem [#allocation3], %s175
        // Predicated region
        $region33: #{tpu_custom_call.1} parent=31 // pred_check
          %p177 = pneg %p43
        $region34: #{tpu_custom_call.1} parent=31 // pred_check_branch
          %179 = sbr.rel (%p177) target = $region36
        $region35: #{tpu_custom_call.1} parent=31 // pred_region
          %180 = dma.done %s173, 128
        $region36: #{tpu_custom_call.1} parent=31 // pred_fallthru
          _
        // Predicated region
        $region37: #{tpu_custom_call.1} parent=31 // pred_check
          %p181 = pneg %p64
        $region38: #{tpu_custom_call.1} parent=31 // pred_check_branch
          %183 = sbr.rel (%p181) target = $region40
        $region39: #{tpu_custom_call.1} parent=31 // pred_region
          %184 = dma.done [#allocation7], 16384
        $region40: #{tpu_custom_call.1} parent=31 // pred_fallthru
          _
        %s185 = sand.u32 %s30, 1
        %s186 = scalar_lea.sflag [#allocation4], %s185
        %s187 = sand.u32 %s30, 1
        %s188 = smul.addr %s187, 8
        %s189 = scalar_lea.vmem [#allocation3], %s188
        %p190 = pneg %p43
        %p191 = pneg %p40
        %p192 = pneg %p64
        %p193 = pneg %p61
        %p194 = pneg %p85
        %p195 = pneg %p82
        %p196 = pneg %p111
        %p197 = pneg %p108
        %s198 = sand.u32 %s98, 1
        %s199 = scalar_lea.sflag [#allocation5], %s198
        %s200 = sand.u32 %s98, 1
        %s201 = smul.addr %s200, 8
        %s202 = scalar_lea.vmem [#allocation8], %s201
        %v203 = vld [vmem:[%s176] sm:$0xff]
        %v205 = vcombine.high %v203, %v203
        %vm207 = vcmask 1043456
        %v208 = vsel %vm207, %v203, -inf
        %v209 = vrot.slane %v208, 4
        %v210 = vmax.f32 %v208, %v209
        %v211 = vrot.slane %v210, 2
        %v212 = vmax.f32 %v210, %v211
        %v213 = vrot.slane %v212, 1
        %v214 = vmax.f32 %v212, %v213
        %v215 = vsel %vm207, %v205, -inf
        %v216 = vrot.slane %v215, 4
        %v217 = vmax.f32 %v215, %v216
        %v218 = vrot.slane %v217, 2
        %v219 = vmax.f32 %v217, %v218
        %v220 = vrot.slane %v219, 1
        %v221 = vmax.f32 %v219, %v220
        %v222 = vsel %vm207, %v203, 0.0
        %v223 = vrot.slane %v222, 4
        %v224 = vadd.f32 %v222, %v223
        %v225 = vrot.slane %v224, 2
        %v226 = vadd.f32 %v224, %v225
        %v227 = vrot.slane %v226, 1
        %v228 = vadd.f32 %v226, %v227
        %v229 = vsel %vm207, %v205, 0.0
        %v230 = vrot.slane %v229, 4
        %v231 = vadd.f32 %v229, %v230
        %v232 = vrot.slane %v231, 2
        %v233 = vadd.f32 %v231, %v232
        %v234 = vrot.slane %v233, 1
        %v235 = vadd.f32 %v233, %v234
        %v236 = vrcp.pop 4.0
        %v237 = vmul.f32 %v228, %v236
        %v238 = vmul.f32 %v235, %v236
        %v239 = vld [vmem:[#allocation6] sm:$0xff]
        %v240 = vld [vmem:[#allocation6 + $0x8] sm:$0xff]
        %v241 = vld [vmem:[#allocation6 + $0x10] sm:$0xff]
        %v242 = vld [vmem:[#allocation6 + $0x18] sm:$0xff]
        %v243 = vld [vmem:[#allocation6 + $0x20] sm:$0xff]
        %v244 = vld [vmem:[#allocation6 + $0x28] sm:$0xff]
        %v245 = vld [vmem:[#allocation6 + $0x30] sm:$0xff]
        %v246 = vld [vmem:[#allocation6 + $0x38] sm:$0xff]
        %v247 = vld [vmem:[#allocation6 + $0x40] sm:$0xff]
        %v248 = vld [vmem:[#allocation6 + $0x48] sm:$0xff]
        %v249 = vld [vmem:[#allocation6 + $0x50] sm:$0xff]
        %v250 = vld [vmem:[#allocation6 + $0x58] sm:$0xff]
        %v251 = vld [vmem:[#allocation6 + $0x60] sm:$0xff]
        %v252 = vld [vmem:[#allocation6 + $0x68] sm:$0xff]
        %v253 = vld [vmem:[#allocation6 + $0x70] sm:$0xff]
        %v254 = vld [vmem:[#allocation6 + $0x78] sm:$0xff]
        %v255 = vld [vmem:[#allocation6 + $0x80] sm:$0xff]
        %v256 = vld [vmem:[#allocation6 + $0x88] sm:$0xff]
        %v257 = vld [vmem:[#allocation6 + $0x90] sm:$0xff]
        %v258 = vld [vmem:[#allocation6 + $0x98] sm:$0xff]
        %v259 = vld [vmem:[#allocation6 + $0xa0] sm:$0xff]
        %v260 = vld [vmem:[#allocation6 + $0xa8] sm:$0xff]
        %v261 = vld [vmem:[#allocation6 + $0xb0] sm:$0xff]
        %v262 = vld [vmem:[#allocation6 + $0xb8] sm:$0xff]
        %v263 = vld [vmem:[#allocation6 + $0xc0] sm:$0xff]
        %v264 = vld [vmem:[#allocation6 + $0xc8] sm:$0xff]
        %v265 = vld [vmem:[#allocation6 + $0xd0] sm:$0xff]
        %v266 = vld [vmem:[#allocation6 + $0xd8] sm:$0xff]
        %v267 = vld [vmem:[#allocation6 + $0xe0] sm:$0xff]
        %v268 = vld [vmem:[#allocation6 + $0xe8] sm:$0xff]
        %v269 = vld [vmem:[#allocation6 + $0xf0] sm:$0xff]
        %v270 = vld [vmem:[#allocation6 + $0xf8] sm:$0xff]
        %v271 = vld [vmem:[#allocation6 + $0x100] sm:$0xff]
        %v272 = vld [vmem:[#allocation6 + $0x108] sm:$0xff]
        %v273 = vld [vmem:[#allocation6 + $0x110] sm:$0xff]
        %v274 = vld [vmem:[#allocation6 + $0x118] sm:$0xff]
        %v275 = vld [vmem:[#allocation6 + $0x120] sm:$0xff]
        %v276 = vld [vmem:[#allocation6 + $0x128] sm:$0xff]
        %v277 = vld [vmem:[#allocation6 + $0x130] sm:$0xff]
        %v278 = vld [vmem:[#allocation6 + $0x138] sm:$0xff]
        %v279 = vld [vmem:[#allocation6 + $0x140] sm:$0xff]
        %v280 = vld [vmem:[#allocation6 + $0x148] sm:$0xff]
        %v281 = vld [vmem:[#allocation6 + $0x150] sm:$0xff]
        %v282 = vld [vmem:[#allocation6 + $0x158] sm:$0xff]
        %v283 = vld [vmem:[#allocation6 + $0x160] sm:$0xff]
        %v284 = vld [vmem:[#allocation6 + $0x168] sm:$0xff]
        %v285 = vld [vmem:[#allocation6 + $0x170] sm:$0xff]
        %v286 = vld [vmem:[#allocation6 + $0x178] sm:$0xff]
        %v287 = vld [vmem:[#allocation6 + $0x180] sm:$0xff]
        %v288 = vld [vmem:[#allocation6 + $0x188] sm:$0xff]
        %v289 = vld [vmem:[#allocation6 + $0x190] sm:$0xff]
        %v290 = vld [vmem:[#allocation6 + $0x198] sm:$0xff]
        %v291 = vld [vmem:[#allocation6 + $0x1a0] sm:$0xff]
        %v292 = vld [vmem:[#allocation6 + $0x1a8] sm:$0xff]
        %v293 = vld [vmem:[#allocation6 + $0x1b0] sm:$0xff]
        %v294 = vld [vmem:[#allocation6 + $0x1b8] sm:$0xff]
        %v295 = vld [vmem:[#allocation6 + $0x1c0] sm:$0xff]
        %v296 = vld [vmem:[#allocation6 + $0x1c8] sm:$0xff]
        %v297 = vld [vmem:[#allocation6 + $0x1d0] sm:$0xff]
        %v298 = vld [vmem:[#allocation6 + $0x1d8] sm:$0xff]
        %v299 = vld [vmem:[#allocation6 + $0x1e0] sm:$0xff]
        %v300 = vld [vmem:[#allocation6 + $0x1e8] sm:$0xff]
        %v301 = vld [vmem:[#allocation6 + $0x1f0] sm:$0xff]
        %v302 = vld [vmem:[#allocation6 + $0x1f8] sm:$0xff]
        %s303 = scalar_lea.vmem [#allocation6], 512
        %v304 = vld [vmem:[%s303] sm:$0xff]
        %v305 = vld [vmem:[%s303 + $0x8] sm:$0xff]
        %v306 = vld [vmem:[%s303 + $0x10] sm:$0xff]
        %v307 = vld [vmem:[%s303 + $0x18] sm:$0xff]
        %v308 = vld [vmem:[%s303 + $0x20] sm:$0xff]
        %v309 = vld [vmem:[%s303 + $0x28] sm:$0xff]
        %v310 = vld [vmem:[%s303 + $0x30] sm:$0xff]
        %v311 = vld [vmem:[%s303 + $0x38] sm:$0xff]
        %v312 = vld [vmem:[%s303 + $0x40] sm:$0xff]
        %v313 = vld [vmem:[%s303 + $0x48] sm:$0xff]
        %v314 = vld [vmem:[%s303 + $0x50] sm:$0xff]
        %v315 = vld [vmem:[%s303 + $0x58] sm:$0xff]
        %v316 = vld [vmem:[%s303 + $0x60] sm:$0xff]
        %v317 = vld [vmem:[%s303 + $0x68] sm:$0xff]
        %v318 = vld [vmem:[%s303 + $0x70] sm:$0xff]
        %v319 = vld [vmem:[%s303 + $0x78] sm:$0xff]
        %v320 = vld [vmem:[%s303 + $0x80] sm:$0xff]
        %v321 = vld [vmem:[%s303 + $0x88] sm:$0xff]
        %v322 = vld [vmem:[%s303 + $0x90] sm:$0xff]
        %v323 = vld [vmem:[%s303 + $0x98] sm:$0xff]
        %v324 = vld [vmem:[%s303 + $0xa0] sm:$0xff]
        %v325 = vld [vmem:[%s303 + $0xa8] sm:$0xff]
        %v326 = vld [vmem:[%s303 + $0xb0] sm:$0xff]
        %v327 = vld [vmem:[%s303 + $0xb8] sm:$0xff]
        %v328 = vld [vmem:[%s303 + $0xc0] sm:$0xff]
        %v329 = vld [vmem:[%s303 + $0xc8] sm:$0xff]
        %v330 = vld [vmem:[%s303 + $0xd0] sm:$0xff]
        %v331 = vld [vmem:[%s303 + $0xd8] sm:$0xff]
        %v332 = vld [vmem:[%s303 + $0xe0] sm:$0xff]
        %v333 = vld [vmem:[%s303 + $0xe8] sm:$0xff]
        %v334 = vld [vmem:[%s303 + $0xf0] sm:$0xff]
        %v335 = vld [vmem:[%s303 + $0xf8] sm:$0xff]
        %v336 = vld [vmem:[%s303 + $0x100] sm:$0xff]
        %v337 = vld [vmem:[%s303 + $0x108] sm:$0xff]
        %v338 = vld [vmem:[%s303 + $0x110] sm:$0xff]
        %v339 = vld [vmem:[%s303 + $0x118] sm:$0xff]
        %v340 = vld [vmem:[%s303 + $0x120] sm:$0xff]
        %v341 = vld [vmem:[%s303 + $0x128] sm:$0xff]
        %v342 = vld [vmem:[%s303 + $0x130] sm:$0xff]
        %v343 = vld [vmem:[%s303 + $0x138] sm:$0xff]
        %v344 = vld [vmem:[%s303 + $0x140] sm:$0xff]
        %v345 = vld [vmem:[%s303 + $0x148] sm:$0xff]
        %v346 = vld [vmem:[%s303 + $0x150] sm:$0xff]
        %v347 = vld [vmem:[%s303 + $0x158] sm:$0xff]
        %v348 = vld [vmem:[%s303 + $0x160] sm:$0xff]
        %v349 = vld [vmem:[%s303 + $0x168] sm:$0xff]
        %v350 = vld [vmem:[%s303 + $0x170] sm:$0xff]
        %v351 = vld [vmem:[%s303 + $0x178] sm:$0xff]
        %v352 = vld [vmem:[%s303 + $0x180] sm:$0xff]
        %v353 = vld [vmem:[%s303 + $0x188] sm:$0xff]
        %v354 = vld [vmem:[%s303 + $0x190] sm:$0xff]
        %v355 = vld [vmem:[%s303 + $0x198] sm:$0xff]
        %v356 = vld [vmem:[%s303 + $0x1a0] sm:$0xff]
        %v357 = vld [vmem:[%s303 + $0x1a8] sm:$0xff]
        %v358 = vld [vmem:[%s303 + $0x1b0] sm:$0xff]
        %v359 = vld [vmem:[%s303 + $0x1b8] sm:$0xff]
        %v360 = vld [vmem:[%s303 + $0x1c0] sm:$0xff]
        %v361 = vld [vmem:[%s303 + $0x1c8] sm:$0xff]
        %v362 = vld [vmem:[%s303 + $0x1d0] sm:$0xff]
        %v363 = vld [vmem:[%s303 + $0x1d8] sm:$0xff]
        %v364 = vld [vmem:[%s303 + $0x1e0] sm:$0xff]
        %v365 = vld [vmem:[%s303 + $0x1e8] sm:$0xff]
        %v366 = vld [vmem:[%s303 + $0x1f0] sm:$0xff]
        %v367 = vld [vmem:[%s303 + $0x1f8] sm:$0xff]
        %v368 = vand.u32 %v305, 4294901760
        %369 = vmatprep.subr.mxu0 %v368
        %v370 = vand.u32 %v304, 4294901760
        %371 = vmatpush1.msra.mxu0 %v370
        %v372 = vand.u32 %v307, 4294901760
        %373 = vmatprep.subr.mxu0 %v372
        %v374 = vand.u32 %v306, 4294901760
        %375 = vmatpush1.msra.mxu0 %v374
        %v376 = vand.u32 %v309, 4294901760
        %377 = vmatprep.subr.mxu0 %v376
        %v378 = vand.u32 %v308, 4294901760
        %379 = vmatpush1.msra.mxu0 %v378
        %v380 = vand.u32 %v311, 4294901760
        %381 = vmatprep.subr.mxu0 %v380
        %v382 = vand.u32 %v310, 4294901760
        %383 = vmatpush1.msra.mxu0 %v382
        %v384 = vand.u32 %v313, 4294901760
        %385 = vmatprep.subr.mxu0 %v384
        %v386 = vand.u32 %v312, 4294901760
        %387 = vmatpush1.msra.mxu0 %v386
        %v388 = vand.u32 %v315, 4294901760
        %389 = vmatprep.subr.mxu0 %v388
        %v390 = vand.u32 %v314, 4294901760
        %391 = vmatpush1.msra.mxu0 %v390
        %v392 = vand.u32 %v317, 4294901760
        %393 = vmatprep.subr.mxu0 %v392
        %v394 = vand.u32 %v316, 4294901760
        %395 = vmatpush1.msra.mxu0 %v394
        %v396 = vand.u32 %v319, 4294901760
        %397 = vmatprep.subr.mxu0 %v396
        %v398 = vand.u32 %v318, 4294901760
        %399 = vmatpush1.msra.mxu0 %v398
        %v400 = vand.u32 %v321, 4294901760
        %401 = vmatprep.subr.mxu0 %v400
        %v402 = vand.u32 %v320, 4294901760
        %403 = vmatpush1.msra.mxu0 %v402
        %v404 = vand.u32 %v323, 4294901760
        %405 = vmatprep.subr.mxu0 %v404
        %v406 = vand.u32 %v322, 4294901760
        %407 = vmatpush1.msra.mxu0 %v406
        %v408 = vand.u32 %v325, 4294901760
        %409 = vmatprep.subr.mxu0 %v408
        %v410 = vand.u32 %v324, 4294901760
        %411 = vmatpush1.msra.mxu0 %v410
        %v412 = vand.u32 %v327, 4294901760
        %413 = vmatprep.subr.mxu0 %v412
        %v414 = vand.u32 %v326, 4294901760
        %415 = vmatpush1.msra.mxu0 %v414
        %v416 = vand.u32 %v329, 4294901760
        %417 = vmatprep.subr.mxu0 %v416
        %v418 = vand.u32 %v328, 4294901760
        %419 = vmatpush1.msra.mxu0 %v418
        %v420 = vand.u32 %v331, 4294901760
        %421 = vmatprep.subr.mxu0 %v420
        %v422 = vand.u32 %v330, 4294901760
        %423 = vmatpush1.msra.mxu0 %v422
        %v424 = vand.u32 %v333, 4294901760
        %425 = vmatprep.subr.mxu0 %v424
        %v426 = vand.u32 %v332, 4294901760
        %427 = vmatpush1.msra.mxu0 %v426
        %v428 = vand.u32 %v335, 4294901760
        %429 = vmatprep.subr.mxu0 %v428
        %v430 = vand.u32 %v334, 4294901760
        %431 = vmatpush1.msra.mxu0 %v430
        %v432 = vand.u32 %v337, 4294901760
        %433 = vmatprep.subr.mxu0 %v432
        %v434 = vand.u32 %v336, 4294901760
        %435 = vmatpush1.msra.mxu0 %v434
        %v436 = vand.u32 %v339, 4294901760
        %437 = vmatprep.subr.mxu0 %v436
        %v438 = vand.u32 %v338, 4294901760
        %439 = vmatpush1.msra.mxu0 %v438
        %v440 = vand.u32 %v341, 4294901760
        %441 = vmatprep.subr.mxu0 %v440
        %v442 = vand.u32 %v340, 4294901760
        %443 = vmatpush1.msra.mxu0 %v442
        %v444 = vand.u32 %v343, 4294901760
        %445 = vmatprep.subr.mxu0 %v444
        %v446 = vand.u32 %v342, 4294901760
        %447 = vmatpush1.msra.mxu0 %v446
        %v448 = vand.u32 %v345, 4294901760
        %449 = vmatprep.subr.mxu0 %v448
        %v450 = vand.u32 %v344, 4294901760
        %451 = vmatpush1.msra.mxu0 %v450
        %v452 = vand.u32 %v347, 4294901760
        %453 = vmatprep.subr.mxu0 %v452
        %v454 = vand.u32 %v346, 4294901760
        %455 = vmatpush1.msra.mxu0 %v454
        %v456 = vand.u32 %v349, 4294901760
        %457 = vmatprep.subr.mxu0 %v456
        %v458 = vand.u32 %v348, 4294901760
        %459 = vmatpush1.msra.mxu0 %v458
        %v460 = vand.u32 %v351, 4294901760
        %461 = vmatprep.subr.mxu0 %v460
        %v462 = vand.u32 %v350, 4294901760
        %463 = vmatpush1.msra.mxu0 %v462
        %v464 = vand.u32 %v353, 4294901760
        %465 = vmatprep.subr.mxu0 %v464
        %v466 = vand.u32 %v352, 4294901760
        %467 = vmatpush1.msra.mxu0 %v466
        %v468 = vand.u32 %v355, 4294901760
        %469 = vmatprep.subr.mxu0 %v468
        %v470 = vand.u32 %v354, 4294901760
        %471 = vmatpush1.msra.mxu0 %v470
        %v472 = vand.u32 %v357, 4294901760
        %473 = vmatprep.subr.mxu0 %v472
        %v474 = vand.u32 %v356, 4294901760
        %475 = vmatpush1.msra.mxu0 %v474
        %v476 = vand.u32 %v359, 4294901760
        %477 = vmatprep.subr.mxu0 %v476
        %v478 = vand.u32 %v358, 4294901760
        %479 = vmatpush1.msra.mxu0 %v478
        %v480 = vand.u32 %v361, 4294901760
        %481 = vmatprep.subr.mxu0 %v480
        %v482 = vand.u32 %v360, 4294901760
        %483 = vmatpush1.msra.mxu0 %v482
        %v484 = vand.u32 %v363, 4294901760
        %485 = vmatprep.subr.mxu0 %v484
        %v486 = vand.u32 %v362, 4294901760
        %487 = vmatpush1.msra.mxu0 %v486
        %v488 = vand.u32 %v365, 4294901760
        %489 = vmatprep.subr.mxu0 %v488
        %v490 = vand.u32 %v364, 4294901760
        %491 = vmatpush1.msra.mxu0 %v490
        %v492 = vand.u32 %v367, 4294901760
        %493 = vmatprep.subr.mxu0 %v492
        %v494 = vand.u32 %v366, 4294901760
        %495 = vmatpush1.msra.mxu0 %v494
        %v496 = vand.u32 %v238, 4294901760
        %v497 = vsub.f32 %v238, %v496
        %v498 = vand.u32 %v497, 4294901760
        %v499 = vsub.f32 %v497, %v498
        %v500 = vand.u32 %v499, 4294901760
        %501 = vmatprep.mubr.f32.mxu0 %v500
        %v502 = vand.u32 %v237, 4294901760
        %v503 = vsub.f32 %v237, %v502
        %v504 = vand.u32 %v503, 4294901760
        %v505 = vsub.f32 %v503, %v504
        %v506 = vand.u32 %v505, 4294901760
        %507 = vmatmul.mubr.f32.gmra.mrb[0].mxu0 %v506
        %v508 = vpop.f32.mrb[0].mxu0
        %v509 = vadd.f32 0.0, %v508
        %v510 = vpop.f32.mrb[0].mxu0
        %v511 = vadd.f32 0.0, %v510
        %512 = vdwg.mxu0
        %v513 = vand.u32 %v305, 4294901760
        %v514 = vsub.f32 %v305, %v513
        %v515 = vand.u32 %v514, 4294901760
        %v516 = vsub.f32 %v514, %v515
        %v517 = vand.u32 %v516, 4294901760
        %518 = vmatprep.subr.mxu0 %v517
        %v519 = vand.u32 %v304, 4294901760
        %v520 = vsub.f32 %v304, %v519
        %v521 = vand.u32 %v520, 4294901760
        %v522 = vsub.f32 %v520, %v521
        %v523 = vand.u32 %v522, 4294901760
        %524 = vmatpush1.msra.mxu0 %v523
        %v525 = vand.u32 %v307, 4294901760
        %v526 = vsub.f32 %v307, %v525
        %v527 = vand.u32 %v526, 4294901760
        %v528 = vsub.f32 %v526, %v527
        %v529 = vand.u32 %v528, 4294901760
        %530 = vmatprep.subr.mxu0 %v529
        %v531 = vand.u32 %v306, 4294901760
        %v532 = vsub.f32 %v306, %v531
        %v533 = vand.u32 %v532, 4294901760
        %v534 = vsub.f32 %v532, %v533
        %v535 = vand.u32 %v534, 4294901760
        %536 = vmatpush1.msra.mxu0 %v535
        %v537 = vand.u32 %v309, 4294901760
        %v538 = vsub.f32 %v309, %v537
        %v539 = vand.u32 %v538, 4294901760
        %v540 = vsub.f32 %v538, %v539
        %v541 = vand.u32 %v540, 4294901760
        %542 = vmatprep.subr.mxu0 %v541
        %v543 = vand.u32 %v308, 4294901760
        %v544 = vsub.f32 %v308, %v543
        %v545 = vand.u32 %v544, 4294901760
        %v546 = vsub.f32 %v544, %v545
        %v547 = vand.u32 %v546, 4294901760
        %548 = vmatpush1.msra.mxu0 %v547
        %v549 = vand.u32 %v311, 4294901760
        %v550 = vsub.f32 %v311, %v549
        %v551 = vand.u32 %v550, 4294901760
        %v552 = vsub.f32 %v550, %v551
        %v553 = vand.u32 %v552, 4294901760
        %554 = vmatprep.subr.mxu0 %v553
        %v555 = vand.u32 %v310, 4294901760
        %v556 = vsub.f32 %v310, %v555
        %v557 = vand.u32 %v556, 4294901760
        %v558 = vsub.f32 %v556, %v557
        %v559 = vand.u32 %v558, 4294901760
        %560 = vmatpush1.msra.mxu0 %v559
        %v561 = vand.u32 %v313, 4294901760
        %v562 = vsub.f32 %v313, %v561
        %v563 = vand.u32 %v562, 4294901760
        %v564 = vsub.f32 %v562, %v563
        %v565 = vand.u32 %v564, 4294901760
        %566 = vmatprep.subr.mxu0 %v565
        %v567 = vand.u32 %v312, 4294901760
        %v568 = vsub.f32 %v312, %v567
        %v569 = vand.u32 %v568, 4294901760
        %v570 = vsub.f32 %v568, %v569
        %v571 = vand.u32 %v570, 4294901760
        %572 = vmatpush1.msra.mxu0 %v571
        %v573 = vand.u32 %v315, 4294901760
        %v574 = vsub.f32 %v315, %v573
        %v575 = vand.u32 %v574, 4294901760
        %v576 = vsub.f32 %v574, %v575
        %v577 = vand.u32 %v576, 4294901760
        %578 = vmatprep.subr.mxu0 %v577
        %v579 = vand.u32 %v314, 4294901760
        %v580 = vsub.f32 %v314, %v579
        %v581 = vand.u32 %v580, 4294901760
        %v582 = vsub.f32 %v580, %v581
        %v583 = vand.u32 %v582, 4294901760
        %584 = vmatpush1.msra.mxu0 %v583
        %v585 = vand.u32 %v317, 4294901760
        %v586 = vsub.f32 %v317, %v585
        %v587 = vand.u32 %v586, 4294901760
        %v588 = vsub.f32 %v586, %v587
        %v589 = vand.u32 %v588, 4294901760
        %590 = vmatprep.subr.mxu0 %v589
        %v591 = vand.u32 %v316, 4294901760
        %v592 = vsub.f32 %v316, %v591
        %v593 = vand.u32 %v592, 4294901760
        %v594 = vsub.f32 %v592, %v593
        %v595 = vand.u32 %v594, 4294901760
        %596 = vmatpush1.msra.mxu0 %v595
        %v597 = vand.u32 %v319, 4294901760
        %v598 = vsub.f32 %v319, %v597
        %v599 = vand.u32 %v598, 4294901760
        %v600 = vsub.f32 %v598, %v599
        %v601 = vand.u32 %v600, 4294901760
        %602 = vmatprep.subr.mxu0 %v601
        %v603 = vand.u32 %v318, 4294901760
        %v604 = vsub.f32 %v318, %v603
        %v605 = vand.u32 %v604, 4294901760
        %v606 = vsub.f32 %v604, %v605
        %v607 = vand.u32 %v606, 4294901760
        %608 = vmatpush1.msra.mxu0 %v607
        %v609 = vand.u32 %v321, 4294901760
        %v610 = vsub.f32 %v321, %v609
        %v611 = vand.u32 %v610, 4294901760
        %v612 = vsub.f32 %v610, %v611
        %v613 = vand.u32 %v612, 4294901760
        %614 = vmatprep.subr.mxu0 %v613
        %v615 = vand.u32 %v320, 4294901760
        %v616 = vsub.f32 %v320, %v615
        %v617 = vand.u32 %v616, 4294901760
        %v618 = vsub.f32 %v616, %v617
        %v619 = vand.u32 %v618, 4294901760
        %620 = vmatpush1.msra.mxu0 %v619
        %v621 = vand.u32 %v323, 4294901760
        %v622 = vsub.f32 %v323, %v621
        %v623 = vand.u32 %v622, 4294901760
        %v624 = vsub.f32 %v622, %v623
        %v625 = vand.u32 %v624, 4294901760
        %626 = vmatprep.subr.mxu0 %v625
        %v627 = vand.u32 %v322, 4294901760
        %v628 = vsub.f32 %v322, %v627
        %v629 = vand.u32 %v628, 4294901760
        %v630 = vsub.f32 %v628, %v629
        %v631 = vand.u32 %v630, 4294901760
        %632 = vmatpush1.msra.mxu0 %v631
        %v633 = vand.u32 %v325, 4294901760
        %v634 = vsub.f32 %v325, %v633
        %v635 = vand.u32 %v634, 4294901760
        %v636 = vsub.f32 %v634, %v635
        %v637 = vand.u32 %v636, 4294901760
        %638 = vmatprep.subr.mxu0 %v637
        %v639 = vand.u32 %v324, 4294901760
        %v640 = vsub.f32 %v324, %v639
        %v641 = vand.u32 %v640, 4294901760
        %v642 = vsub.f32 %v640, %v641
        %v643 = vand.u32 %v642, 4294901760
        %644 = vmatpush1.msra.mxu0 %v643
        %v645 = vand.u32 %v327, 4294901760
        %v646 = vsub.f32 %v327, %v645
        %v647 = vand.u32 %v646, 4294901760
        %v648 = vsub.f32 %v646, %v647
        %v649 = vand.u32 %v648, 4294901760
        %650 = vmatprep.subr.mxu0 %v649
        %v651 = vand.u32 %v326, 4294901760
        %v652 = vsub.f32 %v326, %v651
        %v653 = vand.u32 %v652, 4294901760
        %v654 = vsub.f32 %v652, %v653
        %v655 = vand.u32 %v654, 4294901760
        %656 = vmatpush1.msra.mxu0 %v655
        %v657 = vand.u32 %v329, 4294901760
        %v658 = vsub.f32 %v329, %v657
        %v659 = vand.u32 %v658, 4294901760
        %v660 = vsub.f32 %v658, %v659
        %v661 = vand.u32 %v660, 4294901760
        %662 = vmatprep.subr.mxu0 %v661
        %v663 = vand.u32 %v328, 4294901760
        %v664 = vsub.f32 %v328, %v663
        %v665 = vand.u32 %v664, 4294901760
        %v666 = vsub.f32 %v664, %v665
        %v667 = vand.u32 %v666, 4294901760
        %668 = vmatpush1.msra.mxu0 %v667
        %v669 = vand.u32 %v331, 4294901760
        %v670 = vsub.f32 %v331, %v669
        %v671 = vand.u32 %v670, 4294901760
        %v672 = vsub.f32 %v670, %v671
        %v673 = vand.u32 %v672, 4294901760
        %674 = vmatprep.subr.mxu0 %v673
        %v675 = vand.u32 %v330, 4294901760
        %v676 = vsub.f32 %v330, %v675
        %v677 = vand.u32 %v676, 4294901760
        %v678 = vsub.f32 %v676, %v677
        %v679 = vand.u32 %v678, 4294901760
        %680 = vmatpush1.msra.mxu0 %v679
        %v681 = vand.u32 %v333, 4294901760
        %v682 = vsub.f32 %v333, %v681
        %v683 = vand.u32 %v682, 4294901760
        %v684 = vsub.f32 %v682, %v683
        %v685 = vand.u32 %v684, 4294901760
        %686 = vmatprep.subr.mxu0 %v685
        %v687 = vand.u32 %v332, 4294901760
        %v688 = vsub.f32 %v332, %v687
        %v689 = vand.u32 %v688, 4294901760
        %v690 = vsub.f32 %v688, %v689
        %v691 = vand.u32 %v690, 4294901760
        %692 = vmatpush1.msra.mxu0 %v691
        %v693 = vand.u32 %v335, 4294901760
        %v694 = vsub.f32 %v335, %v693
        %v695 = vand.u32 %v694, 4294901760
        %v696 = vsub.f32 %v694, %v695
        %v697 = vand.u32 %v696, 4294901760
        %698 = vmatprep.subr.mxu0 %v697
        %v699 = vand.u32 %v334, 4294901760
        %v700 = vsub.f32 %v334, %v699
        %v701 = vand.u32 %v700, 4294901760
        %v702 = vsub.f32 %v700, %v701
        %v703 = vand.u32 %v702, 4294901760
        %704 = vmatpush1.msra.mxu0 %v703
        %v705 = vand.u32 %v337, 4294901760
        %v706 = vsub.f32 %v337, %v705
        %v707 = vand.u32 %v706, 4294901760
        %v708 = vsub.f32 %v706, %v707
        %v709 = vand.u32 %v708, 4294901760
        %710 = vmatprep.subr.mxu0 %v709
        %v711 = vand.u32 %v336, 4294901760
        %v712 = vsub.f32 %v336, %v711
        %v713 = vand.u32 %v712, 4294901760
        %v714 = vsub.f32 %v712, %v713
        %v715 = vand.u32 %v714, 4294901760
        %716 = vmatpush1.msra.mxu0 %v715
        %v717 = vand.u32 %v339, 4294901760
        %v718 = vsub.f32 %v339, %v717
        %v719 = vand.u32 %v718, 4294901760
        %v720 = vsub.f32 %v718, %v719
        %v721 = vand.u32 %v720, 4294901760
        %722 = vmatprep.subr.mxu0 %v721
        %v723 = vand.u32 %v338, 4294901760
        %v724 = vsub.f32 %v338, %v723
        %v725 = vand.u32 %v724, 4294901760
        %v726 = vsub.f32 %v724, %v725
        %v727 = vand.u32 %v726, 4294901760
        %728 = vmatpush1.msra.mxu0 %v727
        %v729 = vand.u32 %v341, 4294901760
        %v730 = vsub.f32 %v341, %v729
        %v731 = vand.u32 %v730, 4294901760
        %v732 = vsub.f32 %v730, %v731
        %v733 = vand.u32 %v732, 4294901760
        %734 = vmatprep.subr.mxu0 %v733
        %v735 = vand.u32 %v340, 4294901760
        %v736 = vsub.f32 %v340, %v735
        %v737 = vand.u32 %v736, 4294901760
        %v738 = vsub.f32 %v736, %v737
        %v739 = vand.u32 %v738, 4294901760
        %740 = vmatpush1.msra.mxu0 %v739
        %v741 = vand.u32 %v343, 4294901760
        %v742 = vsub.f32 %v343, %v741
        %v743 = vand.u32 %v742, 4294901760
        %v744 = vsub.f32 %v742, %v743
        %v745 = vand.u32 %v744, 4294901760
        %746 = vmatprep.subr.mxu0 %v745
        %v747 = vand.u32 %v342, 4294901760
        %v748 = vsub.f32 %v342, %v747
        %v749 = vand.u32 %v748, 4294901760
        %v750 = vsub.f32 %v748, %v749
        %v751 = vand.u32 %v750, 4294901760
        %752 = vmatpush1.msra.mxu0 %v751
        %v753 = vand.u32 %v345, 4294901760
        %v754 = vsub.f32 %v345, %v753
        %v755 = vand.u32 %v754, 4294901760
        %v756 = vsub.f32 %v754, %v755
        %v757 = vand.u32 %v756, 4294901760
        %758 = vmatprep.subr.mxu0 %v757
        %v759 = vand.u32 %v344, 4294901760
        %v760 = vsub.f32 %v344, %v759
        %v761 = vand.u32 %v760, 4294901760
        %v762 = vsub.f32 %v760, %v761
        %v763 = vand.u32 %v762, 4294901760
        %764 = vmatpush1.msra.mxu0 %v763
        %v765 = vand.u32 %v347, 4294901760
        %v766 = vsub.f32 %v347, %v765
        %v767 = vand.u32 %v766, 4294901760
        %v768 = vsub.f32 %v766, %v767
        %v769 = vand.u32 %v768, 4294901760
        %770 = vmatprep.subr.mxu0 %v769
        %v771 = vand.u32 %v346, 4294901760
        %v772 = vsub.f32 %v346, %v771
        %v773 = vand.u32 %v772, 4294901760
        %v774 = vsub.f32 %v772, %v773
        %v775 = vand.u32 %v774, 4294901760
        %776 = vmatpush1.msra.mxu0 %v775
        %v777 = vand.u32 %v349, 4294901760
        %v778 = vsub.f32 %v349, %v777
        %v779 = vand.u32 %v778, 4294901760
        %v780 = vsub.f32 %v778, %v779
        %v781 = vand.u32 %v780, 4294901760
        %782 = vmatprep.subr.mxu0 %v781
        %v783 = vand.u32 %v348, 4294901760
        %v784 = vsub.f32 %v348, %v783
        %v785 = vand.u32 %v784, 4294901760
        %v786 = vsub.f32 %v784, %v785
        %v787 = vand.u32 %v786, 4294901760
        %788 = vmatpush1.msra.mxu0 %v787
        %v789 = vand.u32 %v351, 4294901760
        %v790 = vsub.f32 %v351, %v789
        %v791 = vand.u32 %v790, 4294901760
        %v792 = vsub.f32 %v790, %v791
        %v793 = vand.u32 %v792, 4294901760
        %794 = vmatprep.subr.mxu0 %v793
        %v795 = vand.u32 %v350, 4294901760
        %v796 = vsub.f32 %v350, %v795
        %v797 = vand.u32 %v796, 4294901760
        %v798 = vsub.f32 %v796, %v797
        %v799 = vand.u32 %v798, 4294901760
        %800 = vmatpush1.msra.mxu0 %v799
        %v801 = vand.u32 %v353, 4294901760
        %v802 = vsub.f32 %v353, %v801
        %v803 = vand.u32 %v802, 4294901760
        %v804 = vsub.f32 %v802, %v803
        %v805 = vand.u32 %v804, 4294901760
        %806 = vmatprep.subr.mxu0 %v805
        %v807 = vand.u32 %v352, 4294901760
        %v808 = vsub.f32 %v352, %v807
        %v809 = vand.u32 %v808, 4294901760
        %v810 = vsub.f32 %v808, %v809
        %v811 = vand.u32 %v810, 4294901760
        %812 = vmatpush1.msra.mxu0 %v811
        %v813 = vand.u32 %v355, 4294901760
        %v814 = vsub.f32 %v355, %v813
        %v815 = vand.u32 %v814, 4294901760
        %v816 = vsub.f32 %v814, %v815
        %v817 = vand.u32 %v816, 4294901760
        %818 = vmatprep.subr.mxu0 %v817
        %v819 = vand.u32 %v354, 4294901760
        %v820 = vsub.f32 %v354, %v819
        %v821 = vand.u32 %v820, 4294901760
        %v822 = vsub.f32 %v820, %v821
        %v823 = vand.u32 %v822, 4294901760
        %824 = vmatpush1.msra.mxu0 %v823
        %v825 = vand.u32 %v357, 4294901760
        %v826 = vsub.f32 %v357, %v825
        %v827 = vand.u32 %v826, 4294901760
        %v828 = vsub.f32 %v826, %v827
        %v829 = vand.u32 %v828, 4294901760
        %830 = vmatprep.subr.mxu0 %v829
        %v831 = vand.u32 %v356, 4294901760
        %v832 = vsub.f32 %v356, %v831
        %v833 = vand.u32 %v832, 4294901760
        %v834 = vsub.f32 %v832, %v833
        %v835 = vand.u32 %v834, 4294901760
        %836 = vmatpush1.msra.mxu0 %v835
        %v837 = vand.u32 %v359, 4294901760
        %v838 = vsub.f32 %v359, %v837
        %v839 = vand.u32 %v838, 4294901760
        %v840 = vsub.f32 %v838, %v839
        %v841 = vand.u32 %v840, 4294901760
        %842 = vmatprep.subr.mxu0 %v841
        %v843 = vand.u32 %v358, 4294901760
        %v844 = vsub.f32 %v358, %v843
        %v845 = vand.u32 %v844, 4294901760
        %v846 = vsub.f32 %v844, %v845
        %v847 = vand.u32 %v846, 4294901760
        %848 = vmatpush1.msra.mxu0 %v847
        %v849 = vand.u32 %v361, 4294901760
        %v850 = vsub.f32 %v361, %v849
        %v851 = vand.u32 %v850, 4294901760
        %v852 = vsub.f32 %v850, %v851
        %v853 = vand.u32 %v852, 4294901760
        %854 = vmatprep.subr.mxu0 %v853
        %v855 = vand.u32 %v360, 4294901760
        %v856 = vsub.f32 %v360, %v855
        %v857 = vand.u32 %v856, 4294901760
        %v858 = vsub.f32 %v856, %v857
        %v859 = vand.u32 %v858, 4294901760
        %860 = vmatpush1.msra.mxu0 %v859
        %v861 = vand.u32 %v363, 4294901760
        %v862 = vsub.f32 %v363, %v861
        %v863 = vand.u32 %v862, 4294901760
        %v864 = vsub.f32 %v862, %v863
        %v865 = vand.u32 %v864, 4294901760
        %866 = vmatprep.subr.mxu0 %v865
        %v867 = vand.u32 %v362, 4294901760
        %v868 = vsub.f32 %v362, %v867
        %v869 = vand.u32 %v868, 4294901760
        %v870 = vsub.f32 %v868, %v869
        %v871 = vand.u32 %v870, 4294901760
        %872 = vmatpush1.msra.mxu0 %v871
        %v873 = vand.u32 %v365, 4294901760
        %v874 = vsub.f32 %v365, %v873
        %v875 = vand.u32 %v874, 4294901760
        %v876 = vsub.f32 %v874, %v875
        %v877 = vand.u32 %v876, 4294901760
        %878 = vmatprep.subr.mxu0 %v877
        %v879 = vand.u32 %v364, 4294901760
        %v880 = vsub.f32 %v364, %v879
        %v881 = vand.u32 %v880, 4294901760
        %v882 = vsub.f32 %v880, %v881
        %v883 = vand.u32 %v882, 4294901760
        %884 = vmatpush1.msra.mxu0 %v883
        %v885 = vand.u32 %v367, 4294901760
        %v886 = vsub.f32 %v367, %v885
        %v887 = vand.u32 %v886, 4294901760
        %v888 = vsub.f32 %v886, %v887
        %v889 = vand.u32 %v888, 4294901760
        %890 = vmatprep.subr.mxu0 %v889
        %v891 = vand.u32 %v366, 4294901760
        %v892 = vsub.f32 %v366, %v891
        %v893 = vand.u32 %v892, 4294901760
        %v894 = vsub.f32 %v892, %v893
        %v895 = vand.u32 %v894, 4294901760
        %896 = vmatpush1.msra.mxu0 %v895
        %v897 = vand.u32 %v238, 4294901760
        %898 = vmatprep.mubr.f32.mxu0 %v897
        %v899 = vand.u32 %v237, 4294901760
        %900 = vmatmul.mubr.f32.gmra.mrb[0].mxu0 %v899
        %v901 = vpop.f32.mrb[0].mxu0
        %v902 = vadd.f32 %v509, %v901
        %v903 = vpop.f32.mrb[0].mxu0
        %v904 = vadd.f32 %v511, %v903
        %905 = vdwg.mxu0
        %v906 = vand.u32 %v305, 4294901760
        %v907 = vsub.f32 %v305, %v906
        %908 = vmatprep.subr.mxu0 %v907
        %v909 = vand.u32 %v304, 4294901760
        %v910 = vsub.f32 %v304, %v909
        %911 = vmatpush1.msra.mxu0 %v910
        %v912 = vand.u32 %v307, 4294901760
        %v913 = vsub.f32 %v307, %v912
        %914 = vmatprep.subr.mxu0 %v913
        %v915 = vand.u32 %v306, 4294901760
        %v916 = vsub.f32 %v306, %v915
        %917 = vmatpush1.msra.mxu0 %v916
        %v918 = vand.u32 %v309, 4294901760
        %v919 = vsub.f32 %v309, %v918
        %920 = vmatprep.subr.mxu0 %v919
        %v921 = vand.u32 %v308, 4294901760
        %v922 = vsub.f32 %v308, %v921
        %923 = vmatpush1.msra.mxu0 %v922
        %v924 = vand.u32 %v311, 4294901760
        %v925 = vsub.f32 %v311, %v924
        %926 = vmatprep.subr.mxu0 %v925
        %v927 = vand.u32 %v310, 4294901760
        %v928 = vsub.f32 %v310, %v927
        %929 = vmatpush1.msra.mxu0 %v928
        %v930 = vand.u32 %v313, 4294901760
        %v931 = vsub.f32 %v313, %v930
        %932 = vmatprep.subr.mxu0 %v931
        %v933 = vand.u32 %v312, 4294901760
        %v934 = vsub.f32 %v312, %v933
        %935 = vmatpush1.msra.mxu0 %v934
        %v936 = vand.u32 %v315, 4294901760
        %v937 = vsub.f32 %v315, %v936
        %938 = vmatprep.subr.mxu0 %v937
        %v939 = vand.u32 %v314, 4294901760
        %v940 = vsub.f32 %v314, %v939
        %941 = vmatpush1.msra.mxu0 %v940
        %v942 = vand.u32 %v317, 4294901760
        %v943 = vsub.f32 %v317, %v942
        %944 = vmatprep.subr.mxu0 %v943
        %v945 = vand.u32 %v316, 4294901760
        %v946 = vsub.f32 %v316, %v945
        %947 = vmatpush1.msra.mxu0 %v946
        %v948 = vand.u32 %v319, 4294901760
        %v949 = vsub.f32 %v319, %v948
        %950 = vmatprep.subr.mxu0 %v949
        %v951 = vand.u32 %v318, 4294901760
        %v952 = vsub.f32 %v318, %v951
        %953 = vmatpush1.msra.mxu0 %v952
        %v954 = vand.u32 %v321, 4294901760
        %v955 = vsub.f32 %v321, %v954
        %956 = vmatprep.subr.mxu0 %v955
        %v957 = vand.u32 %v320, 4294901760
        %v958 = vsub.f32 %v320, %v957
        %959 = vmatpush1.msra.mxu0 %v958
        %v960 = vand.u32 %v323, 4294901760
        %v961 = vsub.f32 %v323, %v960
        %962 = vmatprep.subr.mxu0 %v961
        %v963 = vand.u32 %v322, 4294901760
        %v964 = vsub.f32 %v322, %v963
        %965 = vmatpush1.msra.mxu0 %v964
        %v966 = vand.u32 %v325, 4294901760
        %v967 = vsub.f32 %v325, %v966
        %968 = vmatprep.subr.mxu0 %v967
        %v969 = vand.u32 %v324, 4294901760
        %v970 = vsub.f32 %v324, %v969
        %971 = vmatpush1.msra.mxu0 %v970
        %v972 = vand.u32 %v327, 4294901760
        %v973 = vsub.f32 %v327, %v972
        %974 = vmatprep.subr.mxu0 %v973
        %v975 = vand.u32 %v326, 4294901760
        %v976 = vsub.f32 %v326, %v975
        %977 = vmatpush1.msra.mxu0 %v976
        %v978 = vand.u32 %v329, 4294901760
        %v979 = vsub.f32 %v329, %v978
        %980 = vmatprep.subr.mxu0 %v979
        %v981 = vand.u32 %v328, 4294901760
        %v982 = vsub.f32 %v328, %v981
        %983 = vmatpush1.msra.mxu0 %v982
        %v984 = vand.u32 %v331, 4294901760
        %v985 = vsub.f32 %v331, %v984
        %986 = vmatprep.subr.mxu0 %v985
        %v987 = vand.u32 %v330, 4294901760
        %v988 = vsub.f32 %v330, %v987
        %989 = vmatpush1.msra.mxu0 %v988
        %v990 = vand.u32 %v333, 4294901760
        %v991 = vsub.f32 %v333, %v990
        %992 = vmatprep.subr.mxu0 %v991
        %v993 = vand.u32 %v332, 4294901760
        %v994 = vsub.f32 %v332, %v993
        %995 = vmatpush1.msra.mxu0 %v994
        %v996 = vand.u32 %v335, 4294901760
        %v997 = vsub.f32 %v335, %v996
        %998 = vmatprep.subr.mxu0 %v997
        %v999 = vand.u32 %v334, 4294901760
        %v1000 = vsub.f32 %v334, %v999
        %1001 = vmatpush1.msra.mxu0 %v1000
        %v1002 = vand.u32 %v337, 4294901760
        %v1003 = vsub.f32 %v337, %v1002
        %1004 = vmatprep.subr.mxu0 %v1003
        %v1005 = vand.u32 %v336, 4294901760
        %v1006 = vsub.f32 %v336, %v1005
        %1007 = vmatpush1.msra.mxu0 %v1006
        %v1008 = vand.u32 %v339, 4294901760
        %v1009 = vsub.f32 %v339, %v1008
        %1010 = vmatprep.subr.mxu0 %v1009
        %v1011 = vand.u32 %v338, 4294901760
        %v1012 = vsub.f32 %v338, %v1011
        %1013 = vmatpush1.msra.mxu0 %v1012
        %v1014 = vand.u32 %v341, 4294901760
        %v1015 = vsub.f32 %v341, %v1014
        %1016 = vmatprep.subr.mxu0 %v1015
        %v1017 = vand.u32 %v340, 4294901760
        %v1018 = vsub.f32 %v340, %v1017
        %1019 = vmatpush1.msra.mxu0 %v1018
        %v1020 = vand.u32 %v343, 4294901760
        %v1021 = vsub.f32 %v343, %v1020
        %1022 = vmatprep.subr.mxu0 %v1021
        %v1023 = vand.u32 %v342, 4294901760
        %v1024 = vsub.f32 %v342, %v1023
        %1025 = vmatpush1.msra.mxu0 %v1024
        %v1026 = vand.u32 %v345, 4294901760
        %v1027 = vsub.f32 %v345, %v1026
        %1028 = vmatprep.subr.mxu0 %v1027
        %v1029 = vand.u32 %v344, 4294901760
        %v1030 = vsub.f32 %v344, %v1029
        %1031 = vmatpush1.msra.mxu0 %v1030
        %v1032 = vand.u32 %v347, 4294901760
        %v1033 = vsub.f32 %v347, %v1032
        %1034 = vmatprep.subr.mxu0 %v1033
        %v1035 = vand.u32 %v346, 4294901760
        %v1036 = vsub.f32 %v346, %v1035
        %1037 = vmatpush1.msra.mxu0 %v1036
        %v1038 = vand.u32 %v349, 4294901760
        %v1039 = vsub.f32 %v349, %v1038
        %1040 = vmatprep.subr.mxu0 %v1039
        %v1041 = vand.u32 %v348, 4294901760
        %v1042 = vsub.f32 %v348, %v1041
        %1043 = vmatpush1.msra.mxu0 %v1042
        %v1044 = vand.u32 %v351, 4294901760
        %v1045 = vsub.f32 %v351, %v1044
        %1046 = vmatprep.subr.mxu0 %v1045
        %v1047 = vand.u32 %v350, 4294901760
        %v1048 = vsub.f32 %v350, %v1047
        %1049 = vmatpush1.msra.mxu0 %v1048
        %v1050 = vand.u32 %v353, 4294901760
        %v1051 = vsub.f32 %v353, %v1050
        %1052 = vmatprep.subr.mxu0 %v1051
        %v1053 = vand.u32 %v352, 4294901760
        %v1054 = vsub.f32 %v352, %v1053
        %1055 = vmatpush1.msra.mxu0 %v1054
        %v1056 = vand.u32 %v355, 4294901760
        %v1057 = vsub.f32 %v355, %v1056
        %1058 = vmatprep.subr.mxu0 %v1057
        %v1059 = vand.u32 %v354, 4294901760
        %v1060 = vsub.f32 %v354, %v1059
        %1061 = vmatpush1.msra.mxu0 %v1060
        %v1062 = vand.u32 %v357, 4294901760
        %v1063 = vsub.f32 %v357, %v1062
        %1064 = vmatprep.subr.mxu0 %v1063
        %v1065 = vand.u32 %v356, 4294901760
        %v1066 = vsub.f32 %v356, %v1065
        %1067 = vmatpush1.msra.mxu0 %v1066
        %v1068 = vand.u32 %v359, 4294901760
        %v1069 = vsub.f32 %v359, %v1068
        %1070 = vmatprep.subr.mxu0 %v1069
        %v1071 = vand.u32 %v358, 4294901760
        %v1072 = vsub.f32 %v358, %v1071
        %1073 = vmatpush1.msra.mxu0 %v1072
        %v1074 = vand.u32 %v361, 4294901760
        %v1075 = vsub.f32 %v361, %v1074
        %1076 = vmatprep.subr.mxu0 %v1075
        %v1077 = vand.u32 %v360, 4294901760
        %v1078 = vsub.f32 %v360, %v1077
        %1079 = vmatpush1.msra.mxu0 %v1078
        %v1080 = vand.u32 %v363, 4294901760
        %v1081 = vsub.f32 %v363, %v1080
        %1082 = vmatprep.subr.mxu0 %v1081
        %v1083 = vand.u32 %v362, 4294901760
        %v1084 = vsub.f32 %v362, %v1083
        %1085 = vmatpush1.msra.mxu0 %v1084
        %v1086 = vand.u32 %v365, 4294901760
        %v1087 = vsub.f32 %v365, %v1086
        %1088 = vmatprep.subr.mxu0 %v1087
        %v1089 = vand.u32 %v364, 4294901760
        %v1090 = vsub.f32 %v364, %v1089
        %1091 = vmatpush1.msra.mxu0 %v1090
        %v1092 = vand.u32 %v367, 4294901760
        %v1093 = vsub.f32 %v367, %v1092
        %1094 = vmatprep.subr.mxu0 %v1093
        %v1095 = vand.u32 %v366, 4294901760
        %v1096 = vsub.f32 %v366, %v1095
        %1097 = vmatpush1.msra.mxu0 %v1096
        %v1098 = vand.u32 %v238, 4294901760
        %v1099 = vsub.f32 %v238, %v1098
        %1100 = vmatprep.mubr.f32.mxu0 %v1099
        %v1101 = vand.u32 %v237, 4294901760
        %v1102 = vsub.f32 %v237, %v1101
        %1103 = vmatmul.mubr.f32.gmra.mrb[0].mxu0 %v1102
        %v1104 = vpop.f32.mrb[0].mxu0
        %v1105 = vadd.f32 %v902, %v1104
        %v1106 = vpop.f32.mrb[0].mxu0
        %v1107 = vadd.f32 %v904, %v1106
        %1108 = vdwg.mxu0
        %v1109 = vand.u32 %v305, 4294901760
        %1110 = vmatprep.subr.mxu0 %v1109
        %v1111 = vand.u32 %v304, 4294901760
        %1112 = vmatpush1.msra.mxu0 %v1111
        %v1113 = vand.u32 %v307, 4294901760
        %1114 = vmatprep.subr.mxu0 %v1113
        %v1115 = vand.u32 %v306, 4294901760
        %1116 = vmatpush1.msra.mxu0 %v1115
        %v1117 = vand.u32 %v309, 4294901760
        %1118 = vmatprep.subr.mxu0 %v1117
        %v1119 = vand.u32 %v308, 4294901760
        %1120 = vmatpush1.msra.mxu0 %v1119
        %v1121 = vand.u32 %v311, 4294901760
        %1122 = vmatprep.subr.mxu0 %v1121
        %v1123 = vand.u32 %v310, 4294901760
        %1124 = vmatpush1.msra.mxu0 %v1123
        %v1125 = vand.u32 %v313, 4294901760
        %1126 = vmatprep.subr.mxu0 %v1125
        %v1127 = vand.u32 %v312, 4294901760
        %1128 = vmatpush1.msra.mxu0 %v1127
        %v1129 = vand.u32 %v315, 4294901760
        %1130 = vmatprep.subr.mxu0 %v1129
        %v1131 = vand.u32 %v314, 4294901760
        %1132 = vmatpush1.msra.mxu0 %v1131
        %v1133 = vand.u32 %v317, 4294901760
        %1134 = vmatprep.subr.mxu0 %v1133
        %v1135 = vand.u32 %v316, 4294901760
        %1136 = vmatpush1.msra.mxu0 %v1135
        %v1137 = vand.u32 %v319, 4294901760
        %1138 = vmatprep.subr.mxu0 %v1137
        %v1139 = vand.u32 %v318, 4294901760
        %1140 = vmatpush1.msra.mxu0 %v1139
        %v1141 = vand.u32 %v321, 4294901760
        %1142 = vmatprep.subr.mxu0 %v1141
        %v1143 = vand.u32 %v320, 4294901760
        %1144 = vmatpush1.msra.mxu0 %v1143
        %v1145 = vand.u32 %v323, 4294901760
        %1146 = vmatprep.subr.mxu0 %v1145
        %v1147 = vand.u32 %v322, 4294901760
        %1148 = vmatpush1.msra.mxu0 %v1147
        %v1149 = vand.u32 %v325, 4294901760
        %1150 = vmatprep.subr.mxu0 %v1149
        %v1151 = vand.u32 %v324, 4294901760
        %1152 = vmatpush1.msra.mxu0 %v1151
        %v1153 = vand.u32 %v327, 4294901760
        %1154 = vmatprep.subr.mxu0 %v1153
        %v1155 = vand.u32 %v326, 4294901760
        %1156 = vmatpush1.msra.mxu0 %v1155
        %v1157 = vand.u32 %v329, 4294901760
        %1158 = vmatprep.subr.mxu0 %v1157
        %v1159 = vand.u32 %v328, 4294901760
        %1160 = vmatpush1.msra.mxu0 %v1159
        %v1161 = vand.u32 %v331, 4294901760
        %1162 = vmatprep.subr.mxu0 %v1161
        %v1163 = vand.u32 %v330, 4294901760
        %1164 = vmatpush1.msra.mxu0 %v1163
        %v1165 = vand.u32 %v333, 4294901760
        %1166 = vmatprep.subr.mxu0 %v1165
        %v1167 = vand.u32 %v332, 4294901760
        %1168 = vmatpush1.msra.mxu0 %v1167
        %v1169 = vand.u32 %v335, 4294901760
        %1170 = vmatprep.subr.mxu0 %v1169
        %v1171 = vand.u32 %v334, 4294901760
        %1172 = vmatpush1.msra.mxu0 %v1171
        %v1173 = vand.u32 %v337, 4294901760
        %1174 = vmatprep.subr.mxu0 %v1173
        %v1175 = vand.u32 %v336, 4294901760
        %1176 = vmatpush1.msra.mxu0 %v1175
        %v1177 = vand.u32 %v339, 4294901760
        %1178 = vmatprep.subr.mxu0 %v1177
        %v1179 = vand.u32 %v338, 4294901760
        %1180 = vmatpush1.msra.mxu0 %v1179
        %v1181 = vand.u32 %v341, 4294901760
        %1182 = vmatprep.subr.mxu0 %v1181
        %v1183 = vand.u32 %v340, 4294901760
        %1184 = vmatpush1.msra.mxu0 %v1183
        %v1185 = vand.u32 %v343, 4294901760
        %1186 = vmatprep.subr.mxu0 %v1185
        %v1187 = vand.u32 %v342, 4294901760
        %1188 = vmatpush1.msra.mxu0 %v1187
        %v1189 = vand.u32 %v345, 4294901760
        %1190 = vmatprep.subr.mxu0 %v1189
        %v1191 = vand.u32 %v344, 4294901760
        %1192 = vmatpush1.msra.mxu0 %v1191
        %v1193 = vand.u32 %v347, 4294901760
        %1194 = vmatprep.subr.mxu0 %v1193
        %v1195 = vand.u32 %v346, 4294901760
        %1196 = vmatpush1.msra.mxu0 %v1195
        %v1197 = vand.u32 %v349, 4294901760
        %1198 = vmatprep.subr.mxu0 %v1197
        %v1199 = vand.u32 %v348, 4294901760
        %1200 = vmatpush1.msra.mxu0 %v1199
        %v1201 = vand.u32 %v351, 4294901760
        %1202 = vmatprep.subr.mxu0 %v1201
        %v1203 = vand.u32 %v350, 4294901760
        %1204 = vmatpush1.msra.mxu0 %v1203
        %v1205 = vand.u32 %v353, 4294901760
        %1206 = vmatprep.subr.mxu0 %v1205
        %v1207 = vand.u32 %v352, 4294901760
        %1208 = vmatpush1.msra.mxu0 %v1207
        %v1209 = vand.u32 %v355, 4294901760
        %1210 = vmatprep.subr.mxu0 %v1209
        %v1211 = vand.u32 %v354, 4294901760
        %1212 = vmatpush1.msra.mxu0 %v1211
        %v1213 = vand.u32 %v357, 4294901760
        %1214 = vmatprep.subr.mxu0 %v1213
        %v1215 = vand.u32 %v356, 4294901760
        %1216 = vmatpush1.msra.mxu0 %v1215
        %v1217 = vand.u32 %v359, 4294901760
        %1218 = vmatprep.subr.mxu0 %v1217
        %v1219 = vand.u32 %v358, 4294901760
        %1220 = vmatpush1.msra.mxu0 %v1219
        %v1221 = vand.u32 %v361, 4294901760
        %1222 = vmatprep.subr.mxu0 %v1221
        %v1223 = vand.u32 %v360, 4294901760
        %1224 = vmatpush1.msra.mxu0 %v1223
        %v1225 = vand.u32 %v363, 4294901760
        %1226 = vmatprep.subr.mxu0 %v1225
        %v1227 = vand.u32 %v362, 4294901760
        %1228 = vmatpush1.msra.mxu0 %v1227
        %v1229 = vand.u32 %v365, 4294901760
        %1230 = vmatprep.subr.mxu0 %v1229
        %v1231 = vand.u32 %v364, 4294901760
        %1232 = vmatpush1.msra.mxu0 %v1231
        %v1233 = vand.u32 %v367, 4294901760
        %1234 = vmatprep.subr.mxu0 %v1233
        %v1235 = vand.u32 %v366, 4294901760
        %1236 = vmatpush1.msra.mxu0 %v1235
        %v1237 = vand.u32 %v238, 4294901760
        %v1238 = vsub.f32 %v238, %v1237
        %v1239 = vand.u32 %v1238, 4294901760
        %1240 = vmatprep.mubr.f32.mxu0 %v1239
        %v1241 = vand.u32 %v237, 4294901760
        %v1242 = vsub.f32 %v237, %v1241
        %v1243 = vand.u32 %v1242, 4294901760
        %1244 = vmatmul.mubr.f32.gmra.mrb[0].mxu0 %v1243
        %v1245 = vpop.f32.mrb[0].mxu0
        %v1246 = vadd.f32 %v1105, %v1245
        %v1247 = vpop.f32.mrb[0].mxu0
        %v1248 = vadd.f32 %v1107, %v1247
        %1249 = vdwg.mxu0
        %v1250 = vand.u32 %v305, 4294901760
        %v1251 = vsub.f32 %v305, %v1250
        %v1252 = vand.u32 %v1251, 4294901760
        %1253 = vmatprep.subr.mxu0 %v1252
        %v1254 = vand.u32 %v304, 4294901760
        %v1255 = vsub.f32 %v304, %v1254
        %v1256 = vand.u32 %v1255, 4294901760
        %1257 = vmatpush1.msra.mxu0 %v1256
        %v1258 = vand.u32 %v307, 4294901760
        %v1259 = vsub.f32 %v307, %v1258
        %v1260 = vand.u32 %v1259, 4294901760
        %1261 = vmatprep.subr.mxu0 %v1260
        %v1262 = vand.u32 %v306, 4294901760
        %v1263 = vsub.f32 %v306, %v1262
        %v1264 = vand.u32 %v1263, 4294901760
        %1265 = vmatpush1.msra.mxu0 %v1264
        %v1266 = vand.u32 %v309, 4294901760
        %v1267 = vsub.f32 %v309, %v1266
        %v1268 = vand.u32 %v1267, 4294901760
        %1269 = vmatprep.subr.mxu0 %v1268
        %v1270 = vand.u32 %v308, 4294901760
        %v1271 = vsub.f32 %v308, %v1270
        %v1272 = vand.u32 %v1271, 4294901760
        %1273 = vmatpush1.msra.mxu0 %v1272
        %v1274 = vand.u32 %v311, 4294901760
        %v1275 = vsub.f32 %v311, %v1274
        %v1276 = vand.u32 %v1275, 4294901760
        %1277 = vmatprep.subr.mxu0 %v1276
        %v1278 = vand.u32 %v310, 4294901760
        %v1279 = vsub.f32 %v310, %v1278
        %v1280 = vand.u32 %v1279, 4294901760
        %1281 = vmatpush1.msra.mxu0 %v1280
        %v1282 = vand.u32 %v313, 4294901760
        %v1283 = vsub.f32 %v313, %v1282
        %v1284 = vand.u32 %v1283, 4294901760
        %1285 = vmatprep.subr.mxu0 %v1284
        %v1286 = vand.u32 %v312, 4294901760
        %v1287 = vsub.f32 %v312, %v1286
        %v1288 = vand.u32 %v1287, 4294901760
        %1289 = vmatpush1.msra.mxu0 %v1288
        %v1290 = vand.u32 %v315, 4294901760
        %v1291 = vsub.f32 %v315, %v1290
        %v1292 = vand.u32 %v1291, 4294901760
        %1293 = vmatprep.subr.mxu0 %v1292
        %v1294 = vand.u32 %v314, 4294901760
        %v1295 = vsub.f32 %v314, %v1294
        %v1296 = vand.u32 %v1295, 4294901760
        %1297 = vmatpush1.msra.mxu0 %v1296
        %v1298 = vand.u32 %v317, 4294901760
        %v1299 = vsub.f32 %v317, %v1298
        %v1300 = vand.u32 %v1299, 4294901760
        %1301 = vmatprep.subr.mxu0 %v1300
        %v1302 = vand.u32 %v316, 4294901760
        %v1303 = vsub.f32 %v316, %v1302
        %v1304 = vand.u32 %v1303, 4294901760
        %1305 = vmatpush1.msra.mxu0 %v1304
        %v1306 = vand.u32 %v319, 4294901760
        %v1307 = vsub.f32 %v319, %v1306
        %v1308 = vand.u32 %v1307, 4294901760
        %1309 = vmatprep.subr.mxu0 %v1308
        %v1310 = vand.u32 %v318, 4294901760
        %v1311 = vsub.f32 %v318, %v1310
        %v1312 = vand.u32 %v1311, 4294901760
        %1313 = vmatpush1.msra.mxu0 %v1312
        %v1314 = vand.u32 %v321, 4294901760
        %v1315 = vsub.f32 %v321, %v1314
        %v1316 = vand.u32 %v1315, 4294901760
        %1317 = vmatprep.subr.mxu0 %v1316
        %v1318 = vand.u32 %v320, 4294901760
        %v1319 = vsub.f32 %v320, %v1318
        %v1320 = vand.u32 %v1319, 4294901760
        %1321 = vmatpush1.msra.mxu0 %v1320
        %v1322 = vand.u32 %v323, 4294901760
        %v1323 = vsub.f32 %v323, %v1322
        %v1324 = vand.u32 %v1323, 4294901760
        %1325 = vmatprep.subr.mxu0 %v1324
        %v1326 = vand.u32 %v322, 4294901760
        %v1327 = vsub.f32 %v322, %v1326
        %v1328 = vand.u32 %v1327, 4294901760
        %1329 = vmatpush1.msra.mxu0 %v1328
        %v1330 = vand.u32 %v325, 4294901760
        %v1331 = vsub.f32 %v325, %v1330
        %v1332 = vand.u32 %v1331, 4294901760
        %1333 = vmatprep.subr.mxu0 %v1332
        %v1334 = vand.u32 %v324, 4294901760
        %v1335 = vsub.f32 %v324, %v1334
        %v1336 = vand.u32 %v1335, 4294901760
        %1337 = vmatpush1.msra.mxu0 %v1336
        %v1338 = vand.u32 %v327, 4294901760
        %v1339 = vsub.f32 %v327, %v1338
        %v1340 = vand.u32 %v1339, 4294901760
        %1341 = vmatprep.subr.mxu0 %v1340
        %v1342 = vand.u32 %v326, 4294901760
        %v1343 = vsub.f32 %v326, %v1342
        %v1344 = vand.u32 %v1343, 4294901760
        %1345 = vmatpush1.msra.mxu0 %v1344
        %v1346 = vand.u32 %v329, 4294901760
        %v1347 = vsub.f32 %v329, %v1346
        %v1348 = vand.u32 %v1347, 4294901760
        %1349 = vmatprep.subr.mxu0 %v1348
        %v1350 = vand.u32 %v328, 4294901760
        %v1351 = vsub.f32 %v328, %v1350
        %v1352 = vand.u32 %v1351, 4294901760
        %1353 = vmatpush1.msra.mxu0 %v1352
        %v1354 = vand.u32 %v331, 4294901760
        %v1355 = vsub.f32 %v331, %v1354
        %v1356 = vand.u32 %v1355, 4294901760
        %1357 = vmatprep.subr.mxu0 %v1356
        %v1358 = vand.u32 %v330, 4294901760
        %v1359 = vsub.f32 %v330, %v1358
        %v1360 = vand.u32 %v1359, 4294901760
        %1361 = vmatpush1.msra.mxu0 %v1360
        %v1362 = vand.u32 %v333, 4294901760
        %v1363 = vsub.f32 %v333, %v1362
        %v1364 = vand.u32 %v1363, 4294901760
        %1365 = vmatprep.subr.mxu0 %v1364
        %v1366 = vand.u32 %v332, 4294901760
        %v1367 = vsub.f32 %v332, %v1366
        %v1368 = vand.u32 %v1367, 4294901760
        %1369 = vmatpush1.msra.mxu0 %v1368
        %v1370 = vand.u32 %v335, 4294901760
        %v1371 = vsub.f32 %v335, %v1370
        %v1372 = vand.u32 %v1371, 4294901760
        %1373 = vmatprep.subr.mxu0 %v1372
        %v1374 = vand.u32 %v334, 4294901760
        %v1375 = vsub.f32 %v334, %v1374
        %v1376 = vand.u32 %v1375, 4294901760
        %1377 = vmatpush1.msra.mxu0 %v1376
        %v1378 = vand.u32 %v337, 4294901760
        %v1379 = vsub.f32 %v337, %v1378
        %v1380 = vand.u32 %v1379, 4294901760
        %1381 = vmatprep.subr.mxu0 %v1380
        %v1382 = vand.u32 %v336, 4294901760
        %v1383 = vsub.f32 %v336, %v1382
        %v1384 = vand.u32 %v1383, 4294901760
        %1385 = vmatpush1.msra.mxu0 %v1384
        %v1386 = vand.u32 %v339, 4294901760
        %v1387 = vsub.f32 %v339, %v1386
        %v1388 = vand.u32 %v1387, 4294901760
        %1389 = vmatprep.subr.mxu0 %v1388
        %v1390 = vand.u32 %v338, 4294901760
        %v1391 = vsub.f32 %v338, %v1390
        %v1392 = vand.u32 %v1391, 4294901760
        %1393 = vmatpush1.msra.mxu0 %v1392
        %v1394 = vand.u32 %v341, 4294901760
        %v1395 = vsub.f32 %v341, %v1394
        %v1396 = vand.u32 %v1395, 4294901760
        %1397 = vmatprep.subr.mxu0 %v1396
        %v1398 = vand.u32 %v340, 4294901760
        %v1399 = vsub.f32 %v340, %v1398
        %v1400 = vand.u32 %v1399, 4294901760
        %1401 = vmatpush1.msra.mxu0 %v1400
        %v1402 = vand.u32 %v343, 4294901760
        %v1403 = vsub.f32 %v343, %v1402
        %v1404 = vand.u32 %v1403, 4294901760
        %1405 = vmatprep.subr.mxu0 %v1404
        %v1406 = vand.u32 %v342, 4294901760
        %v1407 = vsub.f32 %v342, %v1406
        %v1408 = vand.u32 %v1407, 4294901760
        %1409 = vmatpush1.msra.mxu0 %v1408
        %v1410 = vand.u32 %v345, 4294901760
        %v1411 = vsub.f32 %v345, %v1410
        %v1412 = vand.u32 %v1411, 4294901760
        %1413 = vmatprep.subr.mxu0 %v1412
        %v1414 = vand.u32 %v344, 4294901760
        %v1415 = vsub.f32 %v344, %v1414
        %v1416 = vand.u32 %v1415, 4294901760
        %1417 = vmatpush1.msra.mxu0 %v1416
        %v1418 = vand.u32 %v347, 4294901760
        %v1419 = vsub.f32 %v347, %v1418
        %v1420 = vand.u32 %v1419, 4294901760
        %1421 = vmatprep.subr.mxu0 %v1420
        %v1422 = vand.u32 %v346, 4294901760
        %v1423 = vsub.f32 %v346, %v1422
        %v1424 = vand.u32 %v1423, 4294901760
        %1425 = vmatpush1.msra.mxu0 %v1424
        %v1426 = vand.u32 %v349, 4294901760
        %v1427 = vsub.f32 %v349, %v1426
        %v1428 = vand.u32 %v1427, 4294901760
        %1429 = vmatprep.subr.mxu0 %v1428
        %v1430 = vand.u32 %v348, 4294901760
        %v1431 = vsub.f32 %v348, %v1430
        %v1432 = vand.u32 %v1431, 4294901760
        %1433 = vmatpush1.msra.mxu0 %v1432
        %v1434 = vand.u32 %v351, 4294901760
        %v1435 = vsub.f32 %v351, %v1434
        %v1436 = vand.u32 %v1435, 4294901760
        %1437 = vmatprep.subr.mxu0 %v1436
        %v1438 = vand.u32 %v350, 4294901760
        %v1439 = vsub.f32 %v350, %v1438
        %v1440 = vand.u32 %v1439, 4294901760
        %1441 = vmatpush1.msra.mxu0 %v1440
        %v1442 = vand.u32 %v353, 4294901760
        %v1443 = vsub.f32 %v353, %v1442
        %v1444 = vand.u32 %v1443, 4294901760
        %1445 = vmatprep.subr.mxu0 %v1444
        %v1446 = vand.u32 %v352, 4294901760
        %v1447 = vsub.f32 %v352, %v1446
        %v1448 = vand.u32 %v1447, 4294901760
        %1449 = vmatpush1.msra.mxu0 %v1448
        %v1450 = vand.u32 %v355, 4294901760
        %v1451 = vsub.f32 %v355, %v1450
        %v1452 = vand.u32 %v1451, 4294901760
        %1453 = vmatprep.subr.mxu0 %v1452
        %v1454 = vand.u32 %v354, 4294901760
        %v1455 = vsub.f32 %v354, %v1454
        %v1456 = vand.u32 %v1455, 4294901760
        %1457 = vmatpush1.msra.mxu0 %v1456
        %v1458 = vand.u32 %v357, 4294901760
        %v1459 = vsub.f32 %v357, %v1458
        %v1460 = vand.u32 %v1459, 4294901760
        %1461 = vmatprep.subr.mxu0 %v1460
        %v1462 = vand.u32 %v356, 4294901760
        %v1463 = vsub.f32 %v356, %v1462
        %v1464 = vand.u32 %v1463, 4294901760
        %1465 = vmatpush1.msra.mxu0 %v1464
        %v1466 = vand.u32 %v359, 4294901760
        %v1467 = vsub.f32 %v359, %v1466
        %v1468 = vand.u32 %v1467, 4294901760
        %1469 = vmatprep.subr.mxu0 %v1468
        %v1470 = vand.u32 %v358, 4294901760
        %v1471 = vsub.f32 %v358, %v1470
        %v1472 = vand.u32 %v1471, 4294901760
        %1473 = vmatpush1.msra.mxu0 %v1472
        %v1474 = vand.u32 %v361, 4294901760
        %v1475 = vsub.f32 %v361, %v1474
        %v1476 = vand.u32 %v1475, 4294901760
        %1477 = vmatprep.subr.mxu0 %v1476
        %v1478 = vand.u32 %v360, 4294901760
        %v1479 = vsub.f32 %v360, %v1478
        %v1480 = vand.u32 %v1479, 4294901760
        %1481 = vmatpush1.msra.mxu0 %v1480
        %v1482 = vand.u32 %v363, 4294901760
        %v1483 = vsub.f32 %v363, %v1482
        %v1484 = vand.u32 %v1483, 4294901760
        %1485 = vmatprep.subr.mxu0 %v1484
        %v1486 = vand.u32 %v362, 4294901760
        %v1487 = vsub.f32 %v362, %v1486
        %v1488 = vand.u32 %v1487, 4294901760
        %1489 = vmatpush1.msra.mxu0 %v1488
        %v1490 = vand.u32 %v365, 4294901760
        %v1491 = vsub.f32 %v365, %v1490
        %v1492 = vand.u32 %v1491, 4294901760
        %1493 = vmatprep.subr.mxu0 %v1492
        %v1494 = vand.u32 %v364, 4294901760
        %v1495 = vsub.f32 %v364, %v1494
        %v1496 = vand.u32 %v1495, 4294901760
        %1497 = vmatpush1.msra.mxu0 %v1496
        %v1498 = vand.u32 %v367, 4294901760
        %v1499 = vsub.f32 %v367, %v1498
        %v1500 = vand.u32 %v1499, 4294901760
        %1501 = vmatprep.subr.mxu0 %v1500
        %v1502 = vand.u32 %v366, 4294901760
        %v1503 = vsub.f32 %v366, %v1502
        %v1504 = vand.u32 %v1503, 4294901760
        %1505 = vmatpush1.msra.mxu0 %v1504
        %v1506 = vand.u32 %v238, 4294901760
        %1507 = vmatprep.mubr.f32.mxu0 %v1506
        %v1508 = vand.u32 %v237, 4294901760
        %1509 = vmatmul.mubr.f32.gmra.mrb[0].mxu0 %v1508
        %v1510 = vpop.f32.mrb[0].mxu0
        %v1511 = vadd.f32 %v1246, %v1510
        %v1512 = vpop.f32.mrb[0].mxu0
        %v1513 = vadd.f32 %v1248, %v1512
        %1514 = vdwg.mxu0
        %v1515 = vand.u32 %v305, 4294901760
        %1516 = vmatprep.subr.mxu0 %v1515
        %v1517 = vand.u32 %v304, 4294901760
        %1518 = vmatpush1.msra.mxu0 %v1517
        %v1519 = vand.u32 %v307, 4294901760
        %1520 = vmatprep.subr.mxu0 %v1519
        %v1521 = vand.u32 %v306, 4294901760
        %1522 = vmatpush1.msra.mxu0 %v1521
        %v1523 = vand.u32 %v309, 4294901760
        %1524 = vmatprep.subr.mxu0 %v1523
        %v1525 = vand.u32 %v308, 4294901760
        %1526 = vmatpush1.msra.mxu0 %v1525
        %v1527 = vand.u32 %v311, 4294901760
        %1528 = vmatprep.subr.mxu0 %v1527
        %v1529 = vand.u32 %v310, 4294901760
        %1530 = vmatpush1.msra.mxu0 %v1529
        %v1531 = vand.u32 %v313, 4294901760
        %1532 = vmatprep.subr.mxu0 %v1531
        %v1533 = vand.u32 %v312, 4294901760
        %1534 = vmatpush1.msra.mxu0 %v1533
        %v1535 = vand.u32 %v315, 4294901760
        %1536 = vmatprep.subr.mxu0 %v1535
        %v1537 = vand.u32 %v314, 4294901760
        %1538 = vmatpush1.msra.mxu0 %v1537
        %v1539 = vand.u32 %v317, 4294901760
        %1540 = vmatprep.subr.mxu0 %v1539
        %v1541 = vand.u32 %v316, 4294901760
        %1542 = vmatpush1.msra.mxu0 %v1541
        %v1543 = vand.u32 %v319, 4294901760
        %1544 = vmatprep.subr.mxu0 %v1543
        %v1545 = vand.u32 %v318, 4294901760
        %1546 = vmatpush1.msra.mxu0 %v1545
        %v1547 = vand.u32 %v321, 4294901760
        %1548 = vmatprep.subr.mxu0 %v1547
        %v1549 = vand.u32 %v320, 4294901760
        %1550 = vmatpush1.msra.mxu0 %v1549
        %v1551 = vand.u32 %v323, 4294901760
        %1552 = vmatprep.subr.mxu0 %v1551
        %v1553 = vand.u32 %v322, 4294901760
        %1554 = vmatpush1.msra.mxu0 %v1553
        %v1555 = vand.u32 %v325, 4294901760
        %1556 = vmatprep.subr.mxu0 %v1555
        %v1557 = vand.u32 %v324, 4294901760
        %1558 = vmatpush1.msra.mxu0 %v1557
        %v1559 = vand.u32 %v327, 4294901760
        %1560 = vmatprep.subr.mxu0 %v1559
        %v1561 = vand.u32 %v326, 4294901760
        %1562 = vmatpush1.msra.mxu0 %v1561
        %v1563 = vand.u32 %v329, 4294901760
        %1564 = vmatprep.subr.mxu0 %v1563
        %v1565 = vand.u32 %v328, 4294901760
        %1566 = vmatpush1.msra.mxu0 %v1565
        %v1567 = vand.u32 %v331, 4294901760
        %1568 = vmatprep.subr.mxu0 %v1567
        %v1569 = vand.u32 %v330, 4294901760
        %1570 = vmatpush1.msra.mxu0 %v1569
        %v1571 = vand.u32 %v333, 4294901760
        %1572 = vmatprep.subr.mxu0 %v1571
        %v1573 = vand.u32 %v332, 4294901760
        %1574 = vmatpush1.msra.mxu0 %v1573
        %v1575 = vand.u32 %v335, 4294901760
        %1576 = vmatprep.subr.mxu0 %v1575
        %v1577 = vand.u32 %v334, 4294901760
        %1578 = vmatpush1.msra.mxu0 %v1577
        %v1579 = vand.u32 %v337, 4294901760
        %1580 = vmatprep.subr.mxu0 %v1579
        %v1581 = vand.u32 %v336, 4294901760
        %1582 = vmatpush1.msra.mxu0 %v1581
        %v1583 = vand.u32 %v339, 4294901760
        %1584 = vmatprep.subr.mxu0 %v1583
        %v1585 = vand.u32 %v338, 4294901760
        %1586 = vmatpush1.msra.mxu0 %v1585
        %v1587 = vand.u32 %v341, 4294901760
        %1588 = vmatprep.subr.mxu0 %v1587
        %v1589 = vand.u32 %v340, 4294901760
        %1590 = vmatpush1.msra.mxu0 %v1589
        %v1591 = vand.u32 %v343, 4294901760
        %1592 = vmatprep.subr.mxu0 %v1591
        %v1593 = vand.u32 %v342, 4294901760
        %1594 = vmatpush1.msra.mxu0 %v1593
        %v1595 = vand.u32 %v345, 4294901760
        %1596 = vmatprep.subr.mxu0 %v1595
        %v1597 = vand.u32 %v344, 4294901760
        %1598 = vmatpush1.msra.mxu0 %v1597
        %v1599 = vand.u32 %v347, 4294901760
        %1600 = vmatprep.subr.mxu0 %v1599
        %v1601 = vand.u32 %v346, 4294901760
        %1602 = vmatpush1.msra.mxu0 %v1601
        %v1603 = vand.u32 %v349, 4294901760
        %1604 = vmatprep.subr.mxu0 %v1603
        %v1605 = vand.u32 %v348, 4294901760
        %1606 = vmatpush1.msra.mxu0 %v1605
        %v1607 = vand.u32 %v351, 4294901760
        %1608 = vmatprep.subr.mxu0 %v1607
        %v1609 = vand.u32 %v350, 4294901760
        %1610 = vmatpush1.msra.mxu0 %v1609
        %v1611 = vand.u32 %v353, 4294901760
        %1612 = vmatprep.subr.mxu0 %v1611
        %v1613 = vand.u32 %v352, 4294901760
        %1614 = vmatpush1.msra.mxu0 %v1613
        %v1615 = vand.u32 %v355, 4294901760
        %1616 = vmatprep.subr.mxu0 %v1615
        %v1617 = vand.u32 %v354, 4294901760
        %1618 = vmatpush1.msra.mxu0 %v1617
        %v1619 = vand.u32 %v357, 4294901760
        %1620 = vmatprep.subr.mxu0 %v1619
        %v1621 = vand.u32 %v356, 4294901760
        %1622 = vmatpush1.msra.mxu0 %v1621
        %v1623 = vand.u32 %v359, 4294901760
        %1624 = vmatprep.subr.mxu0 %v1623
        %v1625 = vand.u32 %v358, 4294901760
        %1626 = vmatpush1.msra.mxu0 %v1625
        %v1627 = vand.u32 %v361, 4294901760
        %1628 = vmatprep.subr.mxu0 %v1627
        %v1629 = vand.u32 %v360, 4294901760
        %1630 = vmatpush1.msra.mxu0 %v1629
        %v1631 = vand.u32 %v363, 4294901760
        %1632 = vmatprep.subr.mxu0 %v1631
        %v1633 = vand.u32 %v362, 4294901760
        %1634 = vmatpush1.msra.mxu0 %v1633
        %v1635 = vand.u32 %v365, 4294901760
        %1636 = vmatprep.subr.mxu0 %v1635
        %v1637 = vand.u32 %v364, 4294901760
        %1638 = vmatpush1.msra.mxu0 %v1637
        %v1639 = vand.u32 %v367, 4294901760
        %1640 = vmatprep.subr.mxu0 %v1639
        %v1641 = vand.u32 %v366, 4294901760
        %1642 = vmatpush1.msra.mxu0 %v1641
        %v1643 = vand.u32 %v238, 4294901760
        %1644 = vmatprep.mubr.f32.mxu0 %v1643
        %v1645 = vand.u32 %v237, 4294901760
        %1646 = vmatmul.mubr.f32.gmra.mrb[0].mxu0 %v1645
        %v1647 = vpop.f32.mrb[0].mxu0
        %v1648 = vadd.f32 %v1511, %v1647
        %v1649 = vpop.f32.mrb[0].mxu0
        %v1650 = vadd.f32 %v1513, %v1649
        %1651 = vdwg.mxu0
        %v1652 = vand.u32 %v240, 4294901760
        %1653 = vmatprep.subr.mxu0 %v1652
        %v1654 = vand.u32 %v239, 4294901760
        %1655 = vmatpush1.msra.mxu0 %v1654
        %v1656 = vand.u32 %v242, 4294901760
        %1657 = vmatprep.subr.mxu0 %v1656
        %v1658 = vand.u32 %v241, 4294901760
        %1659 = vmatpush1.msra.mxu0 %v1658
        %v1660 = vand.u32 %v244, 4294901760
        %1661 = vmatprep.subr.mxu0 %v1660
        %v1662 = vand.u32 %v243, 4294901760
        %1663 = vmatpush1.msra.mxu0 %v1662
        %v1664 = vand.u32 %v246, 4294901760
        %1665 = vmatprep.subr.mxu0 %v1664
        %v1666 = vand.u32 %v245, 4294901760
        %1667 = vmatpush1.msra.mxu0 %v1666
        %v1668 = vand.u32 %v248, 4294901760
        %1669 = vmatprep.subr.mxu0 %v1668
        %v1670 = vand.u32 %v247, 4294901760
        %1671 = vmatpush1.msra.mxu0 %v1670
        %v1672 = vand.u32 %v250, 4294901760
        %1673 = vmatprep.subr.mxu0 %v1672
        %v1674 = vand.u32 %v249, 4294901760
        %1675 = vmatpush1.msra.mxu0 %v1674
        %v1676 = vand.u32 %v252, 4294901760
        %1677 = vmatprep.subr.mxu0 %v1676
        %v1678 = vand.u32 %v251, 4294901760
        %1679 = vmatpush1.msra.mxu0 %v1678
        %v1680 = vand.u32 %v254, 4294901760
        %1681 = vmatprep.subr.mxu0 %v1680
        %v1682 = vand.u32 %v253, 4294901760
        %1683 = vmatpush1.msra.mxu0 %v1682
        %v1684 = vand.u32 %v256, 4294901760
        %1685 = vmatprep.subr.mxu0 %v1684
        %v1686 = vand.u32 %v255, 4294901760
        %1687 = vmatpush1.msra.mxu0 %v1686
        %v1688 = vand.u32 %v258, 4294901760
        %1689 = vmatprep.subr.mxu0 %v1688
        %v1690 = vand.u32 %v257, 4294901760
        %1691 = vmatpush1.msra.mxu0 %v1690
        %v1692 = vand.u32 %v260, 4294901760
        %1693 = vmatprep.subr.mxu0 %v1692
        %v1694 = vand.u32 %v259, 4294901760
        %1695 = vmatpush1.msra.mxu0 %v1694
        %v1696 = vand.u32 %v262, 4294901760
        %1697 = vmatprep.subr.mxu0 %v1696
        %v1698 = vand.u32 %v261, 4294901760
        %1699 = vmatpush1.msra.mxu0 %v1698
        %v1700 = vand.u32 %v264, 4294901760
        %1701 = vmatprep.subr.mxu0 %v1700
        %v1702 = vand.u32 %v263, 4294901760
        %1703 = vmatpush1.msra.mxu0 %v1702
        %v1704 = vand.u32 %v266, 4294901760
        %1705 = vmatprep.subr.mxu0 %v1704
        %v1706 = vand.u32 %v265, 4294901760
        %1707 = vmatpush1.msra.mxu0 %v1706
        %v1708 = vand.u32 %v268, 4294901760
        %1709 = vmatprep.subr.mxu0 %v1708
        %v1710 = vand.u32 %v267, 4294901760
        %1711 = vmatpush1.msra.mxu0 %v1710
        %v1712 = vand.u32 %v270, 4294901760
        %1713 = vmatprep.subr.mxu0 %v1712
        %v1714 = vand.u32 %v269, 4294901760
        %1715 = vmatpush1.msra.mxu0 %v1714
        %v1716 = vand.u32 %v272, 4294901760
        %1717 = vmatprep.subr.mxu0 %v1716
        %v1718 = vand.u32 %v271, 4294901760
        %1719 = vmatpush1.msra.mxu0 %v1718
        %v1720 = vand.u32 %v274, 4294901760
        %1721 = vmatprep.subr.mxu0 %v1720
        %v1722 = vand.u32 %v273, 4294901760
        %1723 = vmatpush1.msra.mxu0 %v1722
        %v1724 = vand.u32 %v276, 4294901760
        %1725 = vmatprep.subr.mxu0 %v1724
        %v1726 = vand.u32 %v275, 4294901760
        %1727 = vmatpush1.msra.mxu0 %v1726
        %v1728 = vand.u32 %v278, 4294901760
        %1729 = vmatprep.subr.mxu0 %v1728
        %v1730 = vand.u32 %v277, 4294901760
        %1731 = vmatpush1.msra.mxu0 %v1730
        %v1732 = vand.u32 %v280, 4294901760
        %1733 = vmatprep.subr.mxu0 %v1732
        %v1734 = vand.u32 %v279, 4294901760
        %1735 = vmatpush1.msra.mxu0 %v1734
        %v1736 = vand.u32 %v282, 4294901760
        %1737 = vmatprep.subr.mxu0 %v1736
        %v1738 = vand.u32 %v281, 4294901760
        %1739 = vmatpush1.msra.mxu0 %v1738
        %v1740 = vand.u32 %v284, 4294901760
        %1741 = vmatprep.subr.mxu0 %v1740
        %v1742 = vand.u32 %v283, 4294901760
        %1743 = vmatpush1.msra.mxu0 %v1742
        %v1744 = vand.u32 %v286, 4294901760
        %1745 = vmatprep.subr.mxu0 %v1744
        %v1746 = vand.u32 %v285, 4294901760
        %1747 = vmatpush1.msra.mxu0 %v1746
        %v1748 = vand.u32 %v288, 4294901760
        %1749 = vmatprep.subr.mxu0 %v1748
        %v1750 = vand.u32 %v287, 4294901760
        %1751 = vmatpush1.msra.mxu0 %v1750
        %v1752 = vand.u32 %v290, 4294901760
        %1753 = vmatprep.subr.mxu0 %v1752
        %v1754 = vand.u32 %v289, 4294901760
        %1755 = vmatpush1.msra.mxu0 %v1754
        %v1756 = vand.u32 %v292, 4294901760
        %1757 = vmatprep.subr.mxu0 %v1756
        %v1758 = vand.u32 %v291, 4294901760
        %1759 = vmatpush1.msra.mxu0 %v1758
        %v1760 = vand.u32 %v294, 4294901760
        %1761 = vmatprep.subr.mxu0 %v1760
        %v1762 = vand.u32 %v293, 4294901760
        %1763 = vmatpush1.msra.mxu0 %v1762
        %v1764 = vand.u32 %v296, 4294901760
        %1765 = vmatprep.subr.mxu0 %v1764
        %v1766 = vand.u32 %v295, 4294901760
        %1767 = vmatpush1.msra.mxu0 %v1766
        %v1768 = vand.u32 %v298, 4294901760
        %1769 = vmatprep.subr.mxu0 %v1768
        %v1770 = vand.u32 %v297, 4294901760
        %1771 = vmatpush1.msra.mxu0 %v1770
        %v1772 = vand.u32 %v300, 4294901760
        %1773 = vmatprep.subr.mxu0 %v1772
        %v1774 = vand.u32 %v299, 4294901760
        %1775 = vmatpush1.msra.mxu0 %v1774
        %v1776 = vand.u32 %v302, 4294901760
        %1777 = vmatprep.subr.mxu0 %v1776
        %v1778 = vand.u32 %v301, 4294901760
        %1779 = vmatpush1.msra.mxu0 %v1778
        %v1780 = vand.u32 %v221, 4294901760
        %v1781 = vsub.f32 %v221, %v1780
        %v1782 = vand.u32 %v1781, 4294901760
        %v1783 = vsub.f32 %v1781, %v1782
        %v1784 = vand.u32 %v1783, 4294901760
        %1785 = vmatprep.mubr.f32.mxu0 %v1784
        %v1786 = vand.u32 %v214, 4294901760
        %v1787 = vsub.f32 %v214, %v1786
        %v1788 = vand.u32 %v1787, 4294901760
        %v1789 = vsub.f32 %v1787, %v1788
        %v1790 = vand.u32 %v1789, 4294901760
        %1791 = vmatmul.mubr.f32.gmra.mrb[0].mxu0 %v1790
        %v1792 = vpop.f32.mrb[0].mxu0
        %v1793 = vadd.f32 %v1648, %v1792
        %v1794 = vpop.f32.mrb[0].mxu0
        %v1795 = vadd.f32 %v1650, %v1794
        %1796 = vdwg.mxu0
        %v1797 = vand.u32 %v240, 4294901760
        %v1798 = vsub.f32 %v240, %v1797
        %v1799 = vand.u32 %v1798, 4294901760
        %v1800 = vsub.f32 %v1798, %v1799
        %v1801 = vand.u32 %v1800, 4294901760
        %1802 = vmatprep.subr.mxu0 %v1801
        %v1803 = vand.u32 %v239, 4294901760
        %v1804 = vsub.f32 %v239, %v1803
        %v1805 = vand.u32 %v1804, 4294901760
        %v1806 = vsub.f32 %v1804, %v1805
        %v1807 = vand.u32 %v1806, 4294901760
        %1808 = vmatpush1.msra.mxu0 %v1807
        %v1809 = vand.u32 %v242, 4294901760
        %v1810 = vsub.f32 %v242, %v1809
        %v1811 = vand.u32 %v1810, 4294901760
        %v1812 = vsub.f32 %v1810, %v1811
        %v1813 = vand.u32 %v1812, 4294901760
        %1814 = vmatprep.subr.mxu0 %v1813
        %v1815 = vand.u32 %v241, 4294901760
        %v1816 = vsub.f32 %v241, %v1815
        %v1817 = vand.u32 %v1816, 4294901760
        %v1818 = vsub.f32 %v1816, %v1817
        %v1819 = vand.u32 %v1818, 4294901760
        %1820 = vmatpush1.msra.mxu0 %v1819
        %v1821 = vand.u32 %v244, 4294901760
        %v1822 = vsub.f32 %v244, %v1821
        %v1823 = vand.u32 %v1822, 4294901760
        %v1824 = vsub.f32 %v1822, %v1823
        %v1825 = vand.u32 %v1824, 4294901760
        %1826 = vmatprep.subr.mxu0 %v1825
        %v1827 = vand.u32 %v243, 4294901760
        %v1828 = vsub.f32 %v243, %v1827
        %v1829 = vand.u32 %v1828, 4294901760
        %v1830 = vsub.f32 %v1828, %v1829
        %v1831 = vand.u32 %v1830, 4294901760
        %1832 = vmatpush1.msra.mxu0 %v1831
        %v1833 = vand.u32 %v246, 4294901760
        %v1834 = vsub.f32 %v246, %v1833
        %v1835 = vand.u32 %v1834, 4294901760
        %v1836 = vsub.f32 %v1834, %v1835
        %v1837 = vand.u32 %v1836, 4294901760
        %1838 = vmatprep.subr.mxu0 %v1837
        %v1839 = vand.u32 %v245, 4294901760
        %v1840 = vsub.f32 %v245, %v1839
        %v1841 = vand.u32 %v1840, 4294901760
        %v1842 = vsub.f32 %v1840, %v1841
        %v1843 = vand.u32 %v1842, 4294901760
        %1844 = vmatpush1.msra.mxu0 %v1843
        %v1845 = vand.u32 %v248, 4294901760
        %v1846 = vsub.f32 %v248, %v1845
        %v1847 = vand.u32 %v1846, 4294901760
        %v1848 = vsub.f32 %v1846, %v1847
        %v1849 = vand.u32 %v1848, 4294901760
        %1850 = vmatprep.subr.mxu0 %v1849
        %v1851 = vand.u32 %v247, 4294901760
        %v1852 = vsub.f32 %v247, %v1851
        %v1853 = vand.u32 %v1852, 4294901760
        %v1854 = vsub.f32 %v1852, %v1853
        %v1855 = vand.u32 %v1854, 4294901760
        %1856 = vmatpush1.msra.mxu0 %v1855
        %v1857 = vand.u32 %v250, 4294901760
        %v1858 = vsub.f32 %v250, %v1857
        %v1859 = vand.u32 %v1858, 4294901760
        %v1860 = vsub.f32 %v1858, %v1859
        %v1861 = vand.u32 %v1860, 4294901760
        %1862 = vmatprep.subr.mxu0 %v1861
        %v1863 = vand.u32 %v249, 4294901760
        %v1864 = vsub.f32 %v249, %v1863
        %v1865 = vand.u32 %v1864, 4294901760
        %v1866 = vsub.f32 %v1864, %v1865
        %v1867 = vand.u32 %v1866, 4294901760
        %1868 = vmatpush1.msra.mxu0 %v1867
        %v1869 = vand.u32 %v252, 4294901760
        %v1870 = vsub.f32 %v252, %v1869
        %v1871 = vand.u32 %v1870, 4294901760
        %v1872 = vsub.f32 %v1870, %v1871
        %v1873 = vand.u32 %v1872, 4294901760
        %1874 = vmatprep.subr.mxu0 %v1873
        %v1875 = vand.u32 %v251, 4294901760
        %v1876 = vsub.f32 %v251, %v1875
        %v1877 = vand.u32 %v1876, 4294901760
        %v1878 = vsub.f32 %v1876, %v1877
        %v1879 = vand.u32 %v1878, 4294901760
        %1880 = vmatpush1.msra.mxu0 %v1879
        %v1881 = vand.u32 %v254, 4294901760
        %v1882 = vsub.f32 %v254, %v1881
        %v1883 = vand.u32 %v1882, 4294901760
        %v1884 = vsub.f32 %v1882, %v1883
        %v1885 = vand.u32 %v1884, 4294901760
        %1886 = vmatprep.subr.mxu0 %v1885
        %v1887 = vand.u32 %v253, 4294901760
        %v1888 = vsub.f32 %v253, %v1887
        %v1889 = vand.u32 %v1888, 4294901760
        %v1890 = vsub.f32 %v1888, %v1889
        %v1891 = vand.u32 %v1890, 4294901760
        %1892 = vmatpush1.msra.mxu0 %v1891
        %v1893 = vand.u32 %v256, 4294901760
        %v1894 = vsub.f32 %v256, %v1893
        %v1895 = vand.u32 %v1894, 4294901760
        %v1896 = vsub.f32 %v1894, %v1895
        %v1897 = vand.u32 %v1896, 4294901760
        %1898 = vmatprep.subr.mxu0 %v1897
        %v1899 = vand.u32 %v255, 4294901760
        %v1900 = vsub.f32 %v255, %v1899
        %v1901 = vand.u32 %v1900, 4294901760
        %v1902 = vsub.f32 %v1900, %v1901
        %v1903 = vand.u32 %v1902, 4294901760
        %1904 = vmatpush1.msra.mxu0 %v1903
        %v1905 = vand.u32 %v258, 4294901760
        %v1906 = vsub.f32 %v258, %v1905
        %v1907 = vand.u32 %v1906, 4294901760
        %v1908 = vsub.f32 %v1906, %v1907
        %v1909 = vand.u32 %v1908, 4294901760
        %1910 = vmatprep.subr.mxu0 %v1909
        %v1911 = vand.u32 %v257, 4294901760
        %v1912 = vsub.f32 %v257, %v1911
        %v1913 = vand.u32 %v1912, 4294901760
        %v1914 = vsub.f32 %v1912, %v1913
        %v1915 = vand.u32 %v1914, 4294901760
        %1916 = vmatpush1.msra.mxu0 %v1915
        %v1917 = vand.u32 %v260, 4294901760
        %v1918 = vsub.f32 %v260, %v1917
        %v1919 = vand.u32 %v1918, 4294901760
        %v1920 = vsub.f32 %v1918, %v1919
        %v1921 = vand.u32 %v1920, 4294901760
        %1922 = vmatprep.subr.mxu0 %v1921
        %v1923 = vand.u32 %v259, 4294901760
        %v1924 = vsub.f32 %v259, %v1923
        %v1925 = vand.u32 %v1924, 4294901760
        %v1926 = vsub.f32 %v1924, %v1925
        %v1927 = vand.u32 %v1926, 4294901760
        %1928 = vmatpush1.msra.mxu0 %v1927
        %v1929 = vand.u32 %v262, 4294901760
        %v1930 = vsub.f32 %v262, %v1929
        %v1931 = vand.u32 %v1930, 4294901760
        %v1932 = vsub.f32 %v1930, %v1931
        %v1933 = vand.u32 %v1932, 4294901760
        %1934 = vmatprep.subr.mxu0 %v1933
        %v1935 = vand.u32 %v261, 4294901760
        %v1936 = vsub.f32 %v261, %v1935
        %v1937 = vand.u32 %v1936, 4294901760
        %v1938 = vsub.f32 %v1936, %v1937
        %v1939 = vand.u32 %v1938, 4294901760
        %1940 = vmatpush1.msra.mxu0 %v1939
        %v1941 = vand.u32 %v264, 4294901760
        %v1942 = vsub.f32 %v264, %v1941
        %v1943 = vand.u32 %v1942, 4294901760
        %v1944 = vsub.f32 %v1942, %v1943
        %v1945 = vand.u32 %v1944, 4294901760
        %1946 = vmatprep.subr.mxu0 %v1945
        %v1947 = vand.u32 %v263, 4294901760
        %v1948 = vsub.f32 %v263, %v1947
        %v1949 = vand.u32 %v1948, 4294901760
        %v1950 = vsub.f32 %v1948, %v1949
        %v1951 = vand.u32 %v1950, 4294901760
        %1952 = vmatpush1.msra.mxu0 %v1951
        %v1953 = vand.u32 %v266, 4294901760
        %v1954 = vsub.f32 %v266, %v1953
        %v1955 = vand.u32 %v1954, 4294901760
        %v1956 = vsub.f32 %v1954, %v1955
        %v1957 = vand.u32 %v1956, 4294901760
        %1958 = vmatprep.subr.mxu0 %v1957
        %v1959 = vand.u32 %v265, 4294901760
        %v1960 = vsub.f32 %v265, %v1959
        %v1961 = vand.u32 %v1960, 4294901760
        %v1962 = vsub.f32 %v1960, %v1961
        %v1963 = vand.u32 %v1962, 4294901760
        %1964 = vmatpush1.msra.mxu0 %v1963
        %v1965 = vand.u32 %v268, 4294901760
        %v1966 = vsub.f32 %v268, %v1965
        %v1967 = vand.u32 %v1966, 4294901760
        %v1968 = vsub.f32 %v1966, %v1967
        %v1969 = vand.u32 %v1968, 4294901760
        %1970 = vmatprep.subr.mxu0 %v1969
        %v1971 = vand.u32 %v267, 4294901760
        %v1972 = vsub.f32 %v267, %v1971
        %v1973 = vand.u32 %v1972, 4294901760
        %v1974 = vsub.f32 %v1972, %v1973
        %v1975 = vand.u32 %v1974, 4294901760
        %1976 = vmatpush1.msra.mxu0 %v1975
        %v1977 = vand.u32 %v270, 4294901760
        %v1978 = vsub.f32 %v270, %v1977
        %v1979 = vand.u32 %v1978, 4294901760
        %v1980 = vsub.f32 %v1978, %v1979
        %v1981 = vand.u32 %v1980, 4294901760
        %1982 = vmatprep.subr.mxu0 %v1981
        %v1983 = vand.u32 %v269, 4294901760
        %v1984 = vsub.f32 %v269, %v1983
        %v1985 = vand.u32 %v1984, 4294901760
        %v1986 = vsub.f32 %v1984, %v1985
        %v1987 = vand.u32 %v1986, 4294901760
        %1988 = vmatpush1.msra.mxu0 %v1987
        %v1989 = vand.u32 %v272, 4294901760
        %v1990 = vsub.f32 %v272, %v1989
        %v1991 = vand.u32 %v1990, 4294901760
        %v1992 = vsub.f32 %v1990, %v1991
        %v1993 = vand.u32 %v1992, 4294901760
        %1994 = vmatprep.subr.mxu0 %v1993
        %v1995 = vand.u32 %v271, 4294901760
        %v1996 = vsub.f32 %v271, %v1995
        %v1997 = vand.u32 %v1996, 4294901760
        %v1998 = vsub.f32 %v1996, %v1997
        %v1999 = vand.u32 %v1998, 4294901760
        %2000 = vmatpush1.msra.mxu0 %v1999
        %v2001 = vand.u32 %v274, 4294901760
        %v2002 = vsub.f32 %v274, %v2001
        %v2003 = vand.u32 %v2002, 4294901760
        %v2004 = vsub.f32 %v2002, %v2003
        %v2005 = vand.u32 %v2004, 4294901760
        %2006 = vmatprep.subr.mxu0 %v2005
        %v2007 = vand.u32 %v273, 4294901760
        %v2008 = vsub.f32 %v273, %v2007
        %v2009 = vand.u32 %v2008, 4294901760
        %v2010 = vsub.f32 %v2008, %v2009
        %v2011 = vand.u32 %v2010, 4294901760
        %2012 = vmatpush1.msra.mxu0 %v2011
        %v2013 = vand.u32 %v276, 4294901760
        %v2014 = vsub.f32 %v276, %v2013
        %v2015 = vand.u32 %v2014, 4294901760
        %v2016 = vsub.f32 %v2014, %v2015
        %v2017 = vand.u32 %v2016, 4294901760
        %2018 = vmatprep.subr.mxu0 %v2017
        %v2019 = vand.u32 %v275, 4294901760
        %v2020 = vsub.f32 %v275, %v2019
        %v2021 = vand.u32 %v2020, 4294901760
        %v2022 = vsub.f32 %v2020, %v2021
        %v2023 = vand.u32 %v2022, 4294901760
        %2024 = vmatpush1.msra.mxu0 %v2023
        %v2025 = vand.u32 %v278, 4294901760
        %v2026 = vsub.f32 %v278, %v2025
        %v2027 = vand.u32 %v2026, 4294901760
        %v2028 = vsub.f32 %v2026, %v2027
        %v2029 = vand.u32 %v2028, 4294901760
        %2030 = vmatprep.subr.mxu0 %v2029
        %v2031 = vand.u32 %v277, 4294901760
        %v2032 = vsub.f32 %v277, %v2031
        %v2033 = vand.u32 %v2032, 4294901760
        %v2034 = vsub.f32 %v2032, %v2033
        %v2035 = vand.u32 %v2034, 4294901760
        %2036 = vmatpush1.msra.mxu0 %v2035
        %v2037 = vand.u32 %v280, 4294901760
        %v2038 = vsub.f32 %v280, %v2037
        %v2039 = vand.u32 %v2038, 4294901760
        %v2040 = vsub.f32 %v2038, %v2039
        %v2041 = vand.u32 %v2040, 4294901760
        %2042 = vmatprep.subr.mxu0 %v2041
        %v2043 = vand.u32 %v279, 4294901760
        %v2044 = vsub.f32 %v279, %v2043
        %v2045 = vand.u32 %v2044, 4294901760
        %v2046 = vsub.f32 %v2044, %v2045
        %v2047 = vand.u32 %v2046, 4294901760
        %2048 = vmatpush1.msra.mxu0 %v2047
        %v2049 = vand.u32 %v282, 4294901760
        %v2050 = vsub.f32 %v282, %v2049
        %v2051 = vand.u32 %v2050, 4294901760
        %v2052 = vsub.f32 %v2050, %v2051
        %v2053 = vand.u32 %v2052, 4294901760
        %2054 = vmatprep.subr.mxu0 %v2053
        %v2055 = vand.u32 %v281, 4294901760
        %v2056 = vsub.f32 %v281, %v2055
        %v2057 = vand.u32 %v2056, 4294901760
        %v2058 = vsub.f32 %v2056, %v2057
        %v2059 = vand.u32 %v2058, 4294901760
        %2060 = vmatpush1.msra.mxu0 %v2059
        %v2061 = vand.u32 %v284, 4294901760
        %v2062 = vsub.f32 %v284, %v2061
        %v2063 = vand.u32 %v2062, 4294901760
        %v2064 = vsub.f32 %v2062, %v2063
        %v2065 = vand.u32 %v2064, 4294901760
        %2066 = vmatprep.subr.mxu0 %v2065
        %v2067 = vand.u32 %v283, 4294901760
        %v2068 = vsub.f32 %v283, %v2067
        %v2069 = vand.u32 %v2068, 4294901760
        %v2070 = vsub.f32 %v2068, %v2069
        %v2071 = vand.u32 %v2070, 4294901760
        %2072 = vmatpush1.msra.mxu0 %v2071
        %v2073 = vand.u32 %v286, 4294901760
        %v2074 = vsub.f32 %v286, %v2073
        %v2075 = vand.u32 %v2074, 4294901760
        %v2076 = vsub.f32 %v2074, %v2075
        %v2077 = vand.u32 %v2076, 4294901760
        %2078 = vmatprep.subr.mxu0 %v2077
        %v2079 = vand.u32 %v285, 4294901760
        %v2080 = vsub.f32 %v285, %v2079
        %v2081 = vand.u32 %v2080, 4294901760
        %v2082 = vsub.f32 %v2080, %v2081
        %v2083 = vand.u32 %v2082, 4294901760
        %2084 = vmatpush1.msra.mxu0 %v2083
        %v2085 = vand.u32 %v288, 4294901760
        %v2086 = vsub.f32 %v288, %v2085
        %v2087 = vand.u32 %v2086, 4294901760
        %v2088 = vsub.f32 %v2086, %v2087
        %v2089 = vand.u32 %v2088, 4294901760
        %2090 = vmatprep.subr.mxu0 %v2089
        %v2091 = vand.u32 %v287, 4294901760
        %v2092 = vsub.f32 %v287, %v2091
        %v2093 = vand.u32 %v2092, 4294901760
        %v2094 = vsub.f32 %v2092, %v2093
        %v2095 = vand.u32 %v2094, 4294901760
        %2096 = vmatpush1.msra.mxu0 %v2095
        %v2097 = vand.u32 %v290, 4294901760
        %v2098 = vsub.f32 %v290, %v2097
        %v2099 = vand.u32 %v2098, 4294901760
        %v2100 = vsub.f32 %v2098, %v2099
        %v2101 = vand.u32 %v2100, 4294901760
        %2102 = vmatprep.subr.mxu0 %v2101
        %v2103 = vand.u32 %v289, 4294901760
        %v2104 = vsub.f32 %v289, %v2103
        %v2105 = vand.u32 %v2104, 4294901760
        %v2106 = vsub.f32 %v2104, %v2105
        %v2107 = vand.u32 %v2106, 4294901760
        %2108 = vmatpush1.msra.mxu0 %v2107
        %v2109 = vand.u32 %v292, 4294901760
        %v2110 = vsub.f32 %v292, %v2109
        %v2111 = vand.u32 %v2110, 4294901760
        %v2112 = vsub.f32 %v2110, %v2111
        %v2113 = vand.u32 %v2112, 4294901760
        %2114 = vmatprep.subr.mxu0 %v2113
        %v2115 = vand.u32 %v291, 4294901760
        %v2116 = vsub.f32 %v291, %v2115
        %v2117 = vand.u32 %v2116, 4294901760
        %v2118 = vsub.f32 %v2116, %v2117
        %v2119 = vand.u32 %v2118, 4294901760
        %2120 = vmatpush1.msra.mxu0 %v2119
        %v2121 = vand.u32 %v294, 4294901760
        %v2122 = vsub.f32 %v294, %v2121
        %v2123 = vand.u32 %v2122, 4294901760
        %v2124 = vsub.f32 %v2122, %v2123
        %v2125 = vand.u32 %v2124, 4294901760
        %2126 = vmatprep.subr.mxu0 %v2125
        %v2127 = vand.u32 %v293, 4294901760
        %v2128 = vsub.f32 %v293, %v2127
        %v2129 = vand.u32 %v2128, 4294901760
        %v2130 = vsub.f32 %v2128, %v2129
        %v2131 = vand.u32 %v2130, 4294901760
        %2132 = vmatpush1.msra.mxu0 %v2131
        %v2133 = vand.u32 %v296, 4294901760
        %v2134 = vsub.f32 %v296, %v2133
        %v2135 = vand.u32 %v2134, 4294901760
        %v2136 = vsub.f32 %v2134, %v2135
        %v2137 = vand.u32 %v2136, 4294901760
        %2138 = vmatprep.subr.mxu0 %v2137
        %v2139 = vand.u32 %v295, 4294901760
        %v2140 = vsub.f32 %v295, %v2139
        %v2141 = vand.u32 %v2140, 4294901760
        %v2142 = vsub.f32 %v2140, %v2141
        %v2143 = vand.u32 %v2142, 4294901760
        %2144 = vmatpush1.msra.mxu0 %v2143
        %v2145 = vand.u32 %v298, 4294901760
        %v2146 = vsub.f32 %v298, %v2145
        %v2147 = vand.u32 %v2146, 4294901760
        %v2148 = vsub.f32 %v2146, %v2147
        %v2149 = vand.u32 %v2148, 4294901760
        %2150 = vmatprep.subr.mxu0 %v2149
        %v2151 = vand.u32 %v297, 4294901760
        %v2152 = vsub.f32 %v297, %v2151
        %v2153 = vand.u32 %v2152, 4294901760
        %v2154 = vsub.f32 %v2152, %v2153
        %v2155 = vand.u32 %v2154, 4294901760
        %2156 = vmatpush1.msra.mxu0 %v2155
        %v2157 = vand.u32 %v300, 4294901760
        %v2158 = vsub.f32 %v300, %v2157
        %v2159 = vand.u32 %v2158, 4294901760
        %v2160 = vsub.f32 %v2158, %v2159
        %v2161 = vand.u32 %v2160, 4294901760
        %2162 = vmatprep.subr.mxu0 %v2161
        %v2163 = vand.u32 %v299, 4294901760
        %v2164 = vsub.f32 %v299, %v2163
        %v2165 = vand.u32 %v2164, 4294901760
        %v2166 = vsub.f32 %v2164, %v2165
        %v2167 = vand.u32 %v2166, 4294901760
        %2168 = vmatpush1.msra.mxu0 %v2167
        %v2169 = vand.u32 %v302, 4294901760
        %v2170 = vsub.f32 %v302, %v2169
        %v2171 = vand.u32 %v2170, 4294901760
        %v2172 = vsub.f32 %v2170, %v2171
        %v2173 = vand.u32 %v2172, 4294901760
        %2174 = vmatprep.subr.mxu0 %v2173
        %v2175 = vand.u32 %v301, 4294901760
        %v2176 = vsub.f32 %v301, %v2175
        %v2177 = vand.u32 %v2176, 4294901760
        %v2178 = vsub.f32 %v2176, %v2177
        %v2179 = vand.u32 %v2178, 4294901760
        %2180 = vmatpush1.msra.mxu0 %v2179
        %v2181 = vand.u32 %v221, 4294901760
        %2182 = vmatprep.mubr.f32.mxu0 %v2181
        %v2183 = vand.u32 %v214, 4294901760
        %2184 = vmatmul.mubr.f32.gmra.mrb[0].mxu0 %v2183
        %v2185 = vpop.f32.mrb[0].mxu0
        %v2186 = vadd.f32 %v1793, %v2185
        %v2187 = vpop.f32.mrb[0].mxu0
        %v2188 = vadd.f32 %v1795, %v2187
        %2189 = vdwg.mxu0
        %v2190 = vand.u32 %v240, 4294901760
        %v2191 = vsub.f32 %v240, %v2190
        %2192 = vmatprep.subr.mxu0 %v2191
        %v2193 = vand.u32 %v239, 4294901760
        %v2194 = vsub.f32 %v239, %v2193
        %2195 = vmatpush1.msra.mxu0 %v2194
        %v2196 = vand.u32 %v242, 4294901760
        %v2197 = vsub.f32 %v242, %v2196
        %2198 = vmatprep.subr.mxu0 %v2197
        %v2199 = vand.u32 %v241, 4294901760
        %v2200 = vsub.f32 %v241, %v2199
        %2201 = vmatpush1.msra.mxu0 %v2200
        %v2202 = vand.u32 %v244, 4294901760
        %v2203 = vsub.f32 %v244, %v2202
        %2204 = vmatprep.subr.mxu0 %v2203
        %v2205 = vand.u32 %v243, 4294901760
        %v2206 = vsub.f32 %v243, %v2205
        %2207 = vmatpush1.msra.mxu0 %v2206
        %v2208 = vand.u32 %v246, 4294901760
        %v2209 = vsub.f32 %v246, %v2208
        %2210 = vmatprep.subr.mxu0 %v2209
        %v2211 = vand.u32 %v245, 4294901760
        %v2212 = vsub.f32 %v245, %v2211
        %2213 = vmatpush1.msra.mxu0 %v2212
        %v2214 = vand.u32 %v248, 4294901760
        %v2215 = vsub.f32 %v248, %v2214
        %2216 = vmatprep.subr.mxu0 %v2215
        %v2217 = vand.u32 %v247, 4294901760
        %v2218 = vsub.f32 %v247, %v2217
        %2219 = vmatpush1.msra.mxu0 %v2218
        %v2220 = vand.u32 %v250, 4294901760
        %v2221 = vsub.f32 %v250, %v2220
        %2222 = vmatprep.subr.mxu0 %v2221
        %v2223 = vand.u32 %v249, 4294901760
        %v2224 = vsub.f32 %v249, %v2223
        %2225 = vmatpush1.msra.mxu0 %v2224
        %v2226 = vand.u32 %v252, 4294901760
        %v2227 = vsub.f32 %v252, %v2226
        %2228 = vmatprep.subr.mxu0 %v2227
        %v2229 = vand.u32 %v251, 4294901760
        %v2230 = vsub.f32 %v251, %v2229
        %2231 = vmatpush1.msra.mxu0 %v2230
        %v2232 = vand.u32 %v254, 4294901760
        %v2233 = vsub.f32 %v254, %v2232
        %2234 = vmatprep.subr.mxu0 %v2233
        %v2235 = vand.u32 %v253, 4294901760
        %v2236 = vsub.f32 %v253, %v2235
        %2237 = vmatpush1.msra.mxu0 %v2236
        %v2238 = vand.u32 %v256, 4294901760
        %v2239 = vsub.f32 %v256, %v2238
        %2240 = vmatprep.subr.mxu0 %v2239
        %v2241 = vand.u32 %v255, 4294901760
        %v2242 = vsub.f32 %v255, %v2241
        %2243 = vmatpush1.msra.mxu0 %v2242
        %v2244 = vand.u32 %v258, 4294901760
        %v2245 = vsub.f32 %v258, %v2244
        %2246 = vmatprep.subr.mxu0 %v2245
        %v2247 = vand.u32 %v257, 4294901760
        %v2248 = vsub.f32 %v257, %v2247
        %2249 = vmatpush1.msra.mxu0 %v2248
        %v2250 = vand.u32 %v260, 4294901760
        %v2251 = vsub.f32 %v260, %v2250
        %2252 = vmatprep.subr.mxu0 %v2251
        %v2253 = vand.u32 %v259, 4294901760
        %v2254 = vsub.f32 %v259, %v2253
        %2255 = vmatpush1.msra.mxu0 %v2254
        %v2256 = vand.u32 %v262, 4294901760
        %v2257 = vsub.f32 %v262, %v2256
        %2258 = vmatprep.subr.mxu0 %v2257
        %v2259 = vand.u32 %v261, 4294901760
        %v2260 = vsub.f32 %v261, %v2259
        %2261 = vmatpush1.msra.mxu0 %v2260
        %v2262 = vand.u32 %v264, 4294901760
        %v2263 = vsub.f32 %v264, %v2262
        %2264 = vmatprep.subr.mxu0 %v2263
        %v2265 = vand.u32 %v263, 4294901760
        %v2266 = vsub.f32 %v263, %v2265
        %2267 = vmatpush1.msra.mxu0 %v2266
        %v2268 = vand.u32 %v266, 4294901760
        %v2269 = vsub.f32 %v266, %v2268
        %2270 = vmatprep.subr.mxu0 %v2269
        %v2271 = vand.u32 %v265, 4294901760
        %v2272 = vsub.f32 %v265, %v2271
        %2273 = vmatpush1.msra.mxu0 %v2272
        %v2274 = vand.u32 %v268, 4294901760
        %v2275 = vsub.f32 %v268, %v2274
        %2276 = vmatprep.subr.mxu0 %v2275
        %v2277 = vand.u32 %v267, 4294901760
        %v2278 = vsub.f32 %v267, %v2277
        %2279 = vmatpush1.msra.mxu0 %v2278
        %v2280 = vand.u32 %v270, 4294901760
        %v2281 = vsub.f32 %v270, %v2280
        %2282 = vmatprep.subr.mxu0 %v2281
        %v2283 = vand.u32 %v269, 4294901760
        %v2284 = vsub.f32 %v269, %v2283
        %2285 = vmatpush1.msra.mxu0 %v2284
        %v2286 = vand.u32 %v272, 4294901760
        %v2287 = vsub.f32 %v272, %v2286
        %2288 = vmatprep.subr.mxu0 %v2287
        %v2289 = vand.u32 %v271, 4294901760
        %v2290 = vsub.f32 %v271, %v2289
        %2291 = vmatpush1.msra.mxu0 %v2290
        %v2292 = vand.u32 %v274, 4294901760
        %v2293 = vsub.f32 %v274, %v2292
        %2294 = vmatprep.subr.mxu0 %v2293
        %v2295 = vand.u32 %v273, 4294901760
        %v2296 = vsub.f32 %v273, %v2295
        %2297 = vmatpush1.msra.mxu0 %v2296
        %v2298 = vand.u32 %v276, 4294901760
        %v2299 = vsub.f32 %v276, %v2298
        %2300 = vmatprep.subr.mxu0 %v2299
        %v2301 = vand.u32 %v275, 4294901760
        %v2302 = vsub.f32 %v275, %v2301
        %2303 = vmatpush1.msra.mxu0 %v2302
        %v2304 = vand.u32 %v278, 4294901760
        %v2305 = vsub.f32 %v278, %v2304
        %2306 = vmatprep.subr.mxu0 %v2305
        %v2307 = vand.u32 %v277, 4294901760
        %v2308 = vsub.f32 %v277, %v2307
        %2309 = vmatpush1.msra.mxu0 %v2308
        %v2310 = vand.u32 %v280, 4294901760
        %v2311 = vsub.f32 %v280, %v2310
        %2312 = vmatprep.subr.mxu0 %v2311
        %v2313 = vand.u32 %v279, 4294901760
        %v2314 = vsub.f32 %v279, %v2313
        %2315 = vmatpush1.msra.mxu0 %v2314
        %v2316 = vand.u32 %v282, 4294901760
        %v2317 = vsub.f32 %v282, %v2316
        %2318 = vmatprep.subr.mxu0 %v2317
        %v2319 = vand.u32 %v281, 4294901760
        %v2320 = vsub.f32 %v281, %v2319
        %2321 = vmatpush1.msra.mxu0 %v2320
        %v2322 = vand.u32 %v284, 4294901760
        %v2323 = vsub.f32 %v284, %v2322
        %2324 = vmatprep.subr.mxu0 %v2323
        %v2325 = vand.u32 %v283, 4294901760
        %v2326 = vsub.f32 %v283, %v2325
        %2327 = vmatpush1.msra.mxu0 %v2326
        %v2328 = vand.u32 %v286, 4294901760
        %v2329 = vsub.f32 %v286, %v2328
        %2330 = vmatprep.subr.mxu0 %v2329
        %v2331 = vand.u32 %v285, 4294901760
        %v2332 = vsub.f32 %v285, %v2331
        %2333 = vmatpush1.msra.mxu0 %v2332
        %v2334 = vand.u32 %v288, 4294901760
        %v2335 = vsub.f32 %v288, %v2334
        %2336 = vmatprep.subr.mxu0 %v2335
        %v2337 = vand.u32 %v287, 4294901760
        %v2338 = vsub.f32 %v287, %v2337
        %2339 = vmatpush1.msra.mxu0 %v2338
        %v2340 = vand.u32 %v290, 4294901760
        %v2341 = vsub.f32 %v290, %v2340
        %2342 = vmatprep.subr.mxu0 %v2341
        %v2343 = vand.u32 %v289, 4294901760
        %v2344 = vsub.f32 %v289, %v2343
        %2345 = vmatpush1.msra.mxu0 %v2344
        %v2346 = vand.u32 %v292, 4294901760
        %v2347 = vsub.f32 %v292, %v2346
        %2348 = vmatprep.subr.mxu0 %v2347
        %v2349 = vand.u32 %v291, 4294901760
        %v2350 = vsub.f32 %v291, %v2349
        %2351 = vmatpush1.msra.mxu0 %v2350
        %v2352 = vand.u32 %v294, 4294901760
        %v2353 = vsub.f32 %v294, %v2352
        %2354 = vmatprep.subr.mxu0 %v2353
        %v2355 = vand.u32 %v293, 4294901760
        %v2356 = vsub.f32 %v293, %v2355
        %2357 = vmatpush1.msra.mxu0 %v2356
        %v2358 = vand.u32 %v296, 4294901760
        %v2359 = vsub.f32 %v296, %v2358
        %2360 = vmatprep.subr.mxu0 %v2359
        %v2361 = vand.u32 %v295, 4294901760
        %v2362 = vsub.f32 %v295, %v2361
        %2363 = vmatpush1.msra.mxu0 %v2362
        %v2364 = vand.u32 %v298, 4294901760
        %v2365 = vsub.f32 %v298, %v2364
        %2366 = vmatprep.subr.mxu0 %v2365
        %v2367 = vand.u32 %v297, 4294901760
        %v2368 = vsub.f32 %v297, %v2367
        %2369 = vmatpush1.msra.mxu0 %v2368
        %v2370 = vand.u32 %v300, 4294901760
        %v2371 = vsub.f32 %v300, %v2370
        %2372 = vmatprep.subr.mxu0 %v2371
        %v2373 = vand.u32 %v299, 4294901760
        %v2374 = vsub.f32 %v299, %v2373
        %2375 = vmatpush1.msra.mxu0 %v2374
        %v2376 = vand.u32 %v302, 4294901760
        %v2377 = vsub.f32 %v302, %v2376
        %2378 = vmatprep.subr.mxu0 %v2377
        %v2379 = vand.u32 %v301, 4294901760
        %v2380 = vsub.f32 %v301, %v2379
        %2381 = vmatpush1.msra.mxu0 %v2380
        %v2382 = vand.u32 %v221, 4294901760
        %v2383 = vsub.f32 %v221, %v2382
        %2384 = vmatprep.mubr.f32.mxu0 %v2383
        %v2385 = vand.u32 %v214, 4294901760
        %v2386 = vsub.f32 %v214, %v2385
        %2387 = vmatmul.mubr.f32.gmra.mrb[0].mxu0 %v2386
        %v2388 = vpop.f32.mrb[0].mxu0
        %v2389 = vadd.f32 %v2186, %v2388
        %v2390 = vpop.f32.mrb[0].mxu0
        %v2391 = vadd.f32 %v2188, %v2390
        %2392 = vdwg.mxu0
        %v2393 = vand.u32 %v240, 4294901760
        %2394 = vmatprep.subr.mxu0 %v2393
        %v2395 = vand.u32 %v239, 4294901760
        %2396 = vmatpush1.msra.mxu0 %v2395
        %v2397 = vand.u32 %v242, 4294901760
        %2398 = vmatprep.subr.mxu0 %v2397
        %v2399 = vand.u32 %v241, 4294901760
        %2400 = vmatpush1.msra.mxu0 %v2399
        %v2401 = vand.u32 %v244, 4294901760
        %2402 = vmatprep.subr.mxu0 %v2401
        %v2403 = vand.u32 %v243, 4294901760
        %2404 = vmatpush1.msra.mxu0 %v2403
        %v2405 = vand.u32 %v246, 4294901760
        %2406 = vmatprep.subr.mxu0 %v2405
        %v2407 = vand.u32 %v245, 4294901760
        %2408 = vmatpush1.msra.mxu0 %v2407
        %v2409 = vand.u32 %v248, 4294901760
        %2410 = vmatprep.subr.mxu0 %v2409
        %v2411 = vand.u32 %v247, 4294901760
        %2412 = vmatpush1.msra.mxu0 %v2411
        %v2413 = vand.u32 %v250, 4294901760
        %2414 = vmatprep.subr.mxu0 %v2413
        %v2415 = vand.u32 %v249, 4294901760
        %2416 = vmatpush1.msra.mxu0 %v2415
        %v2417 = vand.u32 %v252, 4294901760
        %2418 = vmatprep.subr.mxu0 %v2417
        %v2419 = vand.u32 %v251, 4294901760
        %2420 = vmatpush1.msra.mxu0 %v2419
        %v2421 = vand.u32 %v254, 4294901760
        %2422 = vmatprep.subr.mxu0 %v2421
        %v2423 = vand.u32 %v253, 4294901760
        %2424 = vmatpush1.msra.mxu0 %v2423
        %v2425 = vand.u32 %v256, 4294901760
        %2426 = vmatprep.subr.mxu0 %v2425
        %v2427 = vand.u32 %v255, 4294901760
        %2428 = vmatpush1.msra.mxu0 %v2427
        %v2429 = vand.u32 %v258, 4294901760
        %2430 = vmatprep.subr.mxu0 %v2429
        %v2431 = vand.u32 %v257, 4294901760
        %2432 = vmatpush1.msra.mxu0 %v2431
        %v2433 = vand.u32 %v260, 4294901760
        %2434 = vmatprep.subr.mxu0 %v2433
        %v2435 = vand.u32 %v259, 4294901760
        %2436 = vmatpush1.msra.mxu0 %v2435
        %v2437 = vand.u32 %v262, 4294901760
        %2438 = vmatprep.subr.mxu0 %v2437
        %v2439 = vand.u32 %v261, 4294901760
        %2440 = vmatpush1.msra.mxu0 %v2439
        %v2441 = vand.u32 %v264, 4294901760
        %2442 = vmatprep.subr.mxu0 %v2441
        %v2443 = vand.u32 %v263, 4294901760
        %2444 = vmatpush1.msra.mxu0 %v2443
        %v2445 = vand.u32 %v266, 4294901760
        %2446 = vmatprep.subr.mxu0 %v2445
        %v2447 = vand.u32 %v265, 4294901760
        %2448 = vmatpush1.msra.mxu0 %v2447
        %v2449 = vand.u32 %v268, 4294901760
        %2450 = vmatprep.subr.mxu0 %v2449
        %v2451 = vand.u32 %v267, 4294901760
        %2452 = vmatpush1.msra.mxu0 %v2451
        %v2453 = vand.u32 %v270, 4294901760
        %2454 = vmatprep.subr.mxu0 %v2453
        %v2455 = vand.u32 %v269, 4294901760
        %2456 = vmatpush1.msra.mxu0 %v2455
        %v2457 = vand.u32 %v272, 4294901760
        %2458 = vmatprep.subr.mxu0 %v2457
        %v2459 = vand.u32 %v271, 4294901760
        %2460 = vmatpush1.msra.mxu0 %v2459
        %v2461 = vand.u32 %v274, 4294901760
        %2462 = vmatprep.subr.mxu0 %v2461
        %v2463 = vand.u32 %v273, 4294901760
        %2464 = vmatpush1.msra.mxu0 %v2463
        %v2465 = vand.u32 %v276, 4294901760
        %2466 = vmatprep.subr.mxu0 %v2465
        %v2467 = vand.u32 %v275, 4294901760
        %2468 = vmatpush1.msra.mxu0 %v2467
        %v2469 = vand.u32 %v278, 4294901760
        %2470 = vmatprep.subr.mxu0 %v2469
        %v2471 = vand.u32 %v277, 4294901760
        %2472 = vmatpush1.msra.mxu0 %v2471
        %v2473 = vand.u32 %v280, 4294901760
        %2474 = vmatprep.subr.mxu0 %v2473
        %v2475 = vand.u32 %v279, 4294901760
        %2476 = vmatpush1.msra.mxu0 %v2475
        %v2477 = vand.u32 %v282, 4294901760
        %2478 = vmatprep.subr.mxu0 %v2477
        %v2479 = vand.u32 %v281, 4294901760
        %2480 = vmatpush1.msra.mxu0 %v2479
        %v2481 = vand.u32 %v284, 4294901760
        %2482 = vmatprep.subr.mxu0 %v2481
        %v2483 = vand.u32 %v283, 4294901760
        %2484 = vmatpush1.msra.mxu0 %v2483
        %v2485 = vand.u32 %v286, 4294901760
        %2486 = vmatprep.subr.mxu0 %v2485
        %v2487 = vand.u32 %v285, 4294901760
        %2488 = vmatpush1.msra.mxu0 %v2487
        %v2489 = vand.u32 %v288, 4294901760
        %2490 = vmatprep.subr.mxu0 %v2489
        %v2491 = vand.u32 %v287, 4294901760
        %2492 = vmatpush1.msra.mxu0 %v2491
        %v2493 = vand.u32 %v290, 4294901760
        %2494 = vmatprep.subr.mxu0 %v2493
        %v2495 = vand.u32 %v289, 4294901760
        %2496 = vmatpush1.msra.mxu0 %v2495
        %v2497 = vand.u32 %v292, 4294901760
        %2498 = vmatprep.subr.mxu0 %v2497
        %v2499 = vand.u32 %v291, 4294901760
        %2500 = vmatpush1.msra.mxu0 %v2499
        %v2501 = vand.u32 %v294, 4294901760
        %2502 = vmatprep.subr.mxu0 %v2501
        %v2503 = vand.u32 %v293, 4294901760
        %2504 = vmatpush1.msra.mxu0 %v2503
        %v2505 = vand.u32 %v296, 4294901760
        %2506 = vmatprep.subr.mxu0 %v2505
        %v2507 = vand.u32 %v295, 4294901760
        %2508 = vmatpush1.msra.mxu0 %v2507
        %v2509 = vand.u32 %v298, 4294901760
        %2510 = vmatprep.subr.mxu0 %v2509
        %v2511 = vand.u32 %v297, 4294901760
        %2512 = vmatpush1.msra.mxu0 %v2511
        %v2513 = vand.u32 %v300, 4294901760
        %2514 = vmatprep.subr.mxu0 %v2513
        %v2515 = vand.u32 %v299, 4294901760
        %2516 = vmatpush1.msra.mxu0 %v2515
        %v2517 = vand.u32 %v302, 4294901760
        %2518 = vmatprep.subr.mxu0 %v2517
        %v2519 = vand.u32 %v301, 4294901760
        %2520 = vmatpush1.msra.mxu0 %v2519
        %v2521 = vand.u32 %v221, 4294901760
        %v2522 = vsub.f32 %v221, %v2521
        %v2523 = vand.u32 %v2522, 4294901760
        %2524 = vmatprep.mubr.f32.mxu0 %v2523
        %v2525 = vand.u32 %v214, 4294901760
        %v2526 = vsub.f32 %v214, %v2525
        %v2527 = vand.u32 %v2526, 4294901760
        %2528 = vmatmul.mubr.f32.gmra.mrb[0].mxu0 %v2527
        %v2529 = vpop.f32.mrb[0].mxu0
        %v2530 = vadd.f32 %v2389, %v2529
        %v2531 = vpop.f32.mrb[0].mxu0
        %v2532 = vadd.f32 %v2391, %v2531
        %2533 = vdwg.mxu0
        %v2534 = vand.u32 %v240, 4294901760
        %v2535 = vsub.f32 %v240, %v2534
        %v2536 = vand.u32 %v2535, 4294901760
        %2537 = vmatprep.subr.mxu0 %v2536
        %v2538 = vand.u32 %v239, 4294901760
        %v2539 = vsub.f32 %v239, %v2538
        %v2540 = vand.u32 %v2539, 4294901760
        %2541 = vmatpush1.msra.mxu0 %v2540
        %v2542 = vand.u32 %v242, 4294901760
        %v2543 = vsub.f32 %v242, %v2542
        %v2544 = vand.u32 %v2543, 4294901760
        %2545 = vmatprep.subr.mxu0 %v2544
        %v2546 = vand.u32 %v241, 4294901760
        %v2547 = vsub.f32 %v241, %v2546
        %v2548 = vand.u32 %v2547, 4294901760
        %2549 = vmatpush1.msra.mxu0 %v2548
        %v2550 = vand.u32 %v244, 4294901760
        %v2551 = vsub.f32 %v244, %v2550
        %v2552 = vand.u32 %v2551, 4294901760
        %2553 = vmatprep.subr.mxu0 %v2552
        %v2554 = vand.u32 %v243, 4294901760
        %v2555 = vsub.f32 %v243, %v2554
        %v2556 = vand.u32 %v2555, 4294901760
        %2557 = vmatpush1.msra.mxu0 %v2556
        %v2558 = vand.u32 %v246, 4294901760
        %v2559 = vsub.f32 %v246, %v2558
        %v2560 = vand.u32 %v2559, 4294901760
        %2561 = vmatprep.subr.mxu0 %v2560
        %v2562 = vand.u32 %v245, 4294901760
        %v2563 = vsub.f32 %v245, %v2562
        %v2564 = vand.u32 %v2563, 4294901760
        %2565 = vmatpush1.msra.mxu0 %v2564
        %v2566 = vand.u32 %v248, 4294901760
        %v2567 = vsub.f32 %v248, %v2566
        %v2568 = vand.u32 %v2567, 4294901760
        %2569 = vmatprep.subr.mxu0 %v2568
        %v2570 = vand.u32 %v247, 4294901760
        %v2571 = vsub.f32 %v247, %v2570
        %v2572 = vand.u32 %v2571, 4294901760
        %2573 = vmatpush1.msra.mxu0 %v2572
        %v2574 = vand.u32 %v250, 4294901760
        %v2575 = vsub.f32 %v250, %v2574
        %v2576 = vand.u32 %v2575, 4294901760
        %2577 = vmatprep.subr.mxu0 %v2576
        %v2578 = vand.u32 %v249, 4294901760
        %v2579 = vsub.f32 %v249, %v2578
        %v2580 = vand.u32 %v2579, 4294901760
        %2581 = vmatpush1.msra.mxu0 %v2580
        %v2582 = vand.u32 %v252, 4294901760
        %v2583 = vsub.f32 %v252, %v2582
        %v2584 = vand.u32 %v2583, 4294901760
        %2585 = vmatprep.subr.mxu0 %v2584
        %v2586 = vand.u32 %v251, 4294901760
        %v2587 = vsub.f32 %v251, %v2586
        %v2588 = vand.u32 %v2587, 4294901760
        %2589 = vmatpush1.msra.mxu0 %v2588
        %v2590 = vand.u32 %v254, 4294901760
        %v2591 = vsub.f32 %v254, %v2590
        %v2592 = vand.u32 %v2591, 4294901760
        %2593 = vmatprep.subr.mxu0 %v2592
        %v2594 = vand.u32 %v253, 4294901760
        %v2595 = vsub.f32 %v253, %v2594
        %v2596 = vand.u32 %v2595, 4294901760
        %2597 = vmatpush1.msra.mxu0 %v2596
        %v2598 = vand.u32 %v256, 4294901760
        %v2599 = vsub.f32 %v256, %v2598
        %v2600 = vand.u32 %v2599, 4294901760
        %2601 = vmatprep.subr.mxu0 %v2600
        %v2602 = vand.u32 %v255, 4294901760
        %v2603 = vsub.f32 %v255, %v2602
        %v2604 = vand.u32 %v2603, 4294901760
        %2605 = vmatpush1.msra.mxu0 %v2604
        %v2606 = vand.u32 %v258, 4294901760
        %v2607 = vsub.f32 %v258, %v2606
        %v2608 = vand.u32 %v2607, 4294901760
        %2609 = vmatprep.subr.mxu0 %v2608
        %v2610 = vand.u32 %v257, 4294901760
        %v2611 = vsub.f32 %v257, %v2610
        %v2612 = vand.u32 %v2611, 4294901760
        %2613 = vmatpush1.msra.mxu0 %v2612
        %v2614 = vand.u32 %v260, 4294901760
        %v2615 = vsub.f32 %v260, %v2614
        %v2616 = vand.u32 %v2615, 4294901760
        %2617 = vmatprep.subr.mxu0 %v2616
        %v2618 = vand.u32 %v259, 4294901760
        %v2619 = vsub.f32 %v259, %v2618
        %v2620 = vand.u32 %v2619, 4294901760
        %2621 = vmatpush1.msra.mxu0 %v2620
        %v2622 = vand.u32 %v262, 4294901760
        %v2623 = vsub.f32 %v262, %v2622
        %v2624 = vand.u32 %v2623, 4294901760
        %2625 = vmatprep.subr.mxu0 %v2624
        %v2626 = vand.u32 %v261, 4294901760
        %v2627 = vsub.f32 %v261, %v2626
        %v2628 = vand.u32 %v2627, 4294901760
        %2629 = vmatpush1.msra.mxu0 %v2628
        %v2630 = vand.u32 %v264, 4294901760
        %v2631 = vsub.f32 %v264, %v2630
        %v2632 = vand.u32 %v2631, 4294901760
        %2633 = vmatprep.subr.mxu0 %v2632
        %v2634 = vand.u32 %v263, 4294901760
        %v2635 = vsub.f32 %v263, %v2634
        %v2636 = vand.u32 %v2635, 4294901760
        %2637 = vmatpush1.msra.mxu0 %v2636
        %v2638 = vand.u32 %v266, 4294901760
        %v2639 = vsub.f32 %v266, %v2638
        %v2640 = vand.u32 %v2639, 4294901760
        %2641 = vmatprep.subr.mxu0 %v2640
        %v2642 = vand.u32 %v265, 4294901760
        %v2643 = vsub.f32 %v265, %v2642
        %v2644 = vand.u32 %v2643, 4294901760
        %2645 = vmatpush1.msra.mxu0 %v2644
        %v2646 = vand.u32 %v268, 4294901760
        %v2647 = vsub.f32 %v268, %v2646
        %v2648 = vand.u32 %v2647, 4294901760
        %2649 = vmatprep.subr.mxu0 %v2648
        %v2650 = vand.u32 %v267, 4294901760
        %v2651 = vsub.f32 %v267, %v2650
        %v2652 = vand.u32 %v2651, 4294901760
        %2653 = vmatpush1.msra.mxu0 %v2652
        %v2654 = vand.u32 %v270, 4294901760
        %v2655 = vsub.f32 %v270, %v2654
        %v2656 = vand.u32 %v2655, 4294901760
        %2657 = vmatprep.subr.mxu0 %v2656
        %v2658 = vand.u32 %v269, 4294901760
        %v2659 = vsub.f32 %v269, %v2658
        %v2660 = vand.u32 %v2659, 4294901760
        %2661 = vmatpush1.msra.mxu0 %v2660
        %v2662 = vand.u32 %v272, 4294901760
        %v2663 = vsub.f32 %v272, %v2662
        %v2664 = vand.u32 %v2663, 4294901760
        %2665 = vmatprep.subr.mxu0 %v2664
        %v2666 = vand.u32 %v271, 4294901760
        %v2667 = vsub.f32 %v271, %v2666
        %v2668 = vand.u32 %v2667, 4294901760
        %2669 = vmatpush1.msra.mxu0 %v2668
        %v2670 = vand.u32 %v274, 4294901760
        %v2671 = vsub.f32 %v274, %v2670
        %v2672 = vand.u32 %v2671, 4294901760
        %2673 = vmatprep.subr.mxu0 %v2672
        %v2674 = vand.u32 %v273, 4294901760
        %v2675 = vsub.f32 %v273, %v2674
        %v2676 = vand.u32 %v2675, 4294901760
        %2677 = vmatpush1.msra.mxu0 %v2676
        %v2678 = vand.u32 %v276, 4294901760
        %v2679 = vsub.f32 %v276, %v2678
        %v2680 = vand.u32 %v2679, 4294901760
        %2681 = vmatprep.subr.mxu0 %v2680
        %v2682 = vand.u32 %v275, 4294901760
        %v2683 = vsub.f32 %v275, %v2682
        %v2684 = vand.u32 %v2683, 4294901760
        %2685 = vmatpush1.msra.mxu0 %v2684
        %v2686 = vand.u32 %v278, 4294901760
        %v2687 = vsub.f32 %v278, %v2686
        %v2688 = vand.u32 %v2687, 4294901760
        %2689 = vmatprep.subr.mxu0 %v2688
        %v2690 = vand.u32 %v277, 4294901760
        %v2691 = vsub.f32 %v277, %v2690
        %v2692 = vand.u32 %v2691, 4294901760
        %2693 = vmatpush1.msra.mxu0 %v2692
        %v2694 = vand.u32 %v280, 4294901760
        %v2695 = vsub.f32 %v280, %v2694
        %v2696 = vand.u32 %v2695, 4294901760
        %2697 = vmatprep.subr.mxu0 %v2696
        %v2698 = vand.u32 %v279, 4294901760
        %v2699 = vsub.f32 %v279, %v2698
        %v2700 = vand.u32 %v2699, 4294901760
        %2701 = vmatpush1.msra.mxu0 %v2700
        %v2702 = vand.u32 %v282, 4294901760
        %v2703 = vsub.f32 %v282, %v2702
        %v2704 = vand.u32 %v2703, 4294901760
        %2705 = vmatprep.subr.mxu0 %v2704
        %v2706 = vand.u32 %v281, 4294901760
        %v2707 = vsub.f32 %v281, %v2706
        %v2708 = vand.u32 %v2707, 4294901760
        %2709 = vmatpush1.msra.mxu0 %v2708
        %v2710 = vand.u32 %v284, 4294901760
        %v2711 = vsub.f32 %v284, %v2710
        %v2712 = vand.u32 %v2711, 4294901760
        %2713 = vmatprep.subr.mxu0 %v2712
        %v2714 = vand.u32 %v283, 4294901760
        %v2715 = vsub.f32 %v283, %v2714
        %v2716 = vand.u32 %v2715, 4294901760
        %2717 = vmatpush1.msra.mxu0 %v2716
        %v2718 = vand.u32 %v286, 4294901760
        %v2719 = vsub.f32 %v286, %v2718
        %v2720 = vand.u32 %v2719, 4294901760
        %2721 = vmatprep.subr.mxu0 %v2720
        %v2722 = vand.u32 %v285, 4294901760
        %v2723 = vsub.f32 %v285, %v2722
        %v2724 = vand.u32 %v2723, 4294901760
        %2725 = vmatpush1.msra.mxu0 %v2724
        %v2726 = vand.u32 %v288, 4294901760
        %v2727 = vsub.f32 %v288, %v2726
        %v2728 = vand.u32 %v2727, 4294901760
        %2729 = vmatprep.subr.mxu0 %v2728
        %v2730 = vand.u32 %v287, 4294901760
        %v2731 = vsub.f32 %v287, %v2730
        %v2732 = vand.u32 %v2731, 4294901760
        %2733 = vmatpush1.msra.mxu0 %v2732
        %v2734 = vand.u32 %v290, 4294901760
        %v2735 = vsub.f32 %v290, %v2734
        %v2736 = vand.u32 %v2735, 4294901760
        %2737 = vmatprep.subr.mxu0 %v2736
        %v2738 = vand.u32 %v289, 4294901760
        %v2739 = vsub.f32 %v289, %v2738
        %v2740 = vand.u32 %v2739, 4294901760
        %2741 = vmatpush1.msra.mxu0 %v2740
        %v2742 = vand.u32 %v292, 4294901760
        %v2743 = vsub.f32 %v292, %v2742
        %v2744 = vand.u32 %v2743, 4294901760
        %2745 = vmatprep.subr.mxu0 %v2744
        %v2746 = vand.u32 %v291, 4294901760
        %v2747 = vsub.f32 %v291, %v2746
        %v2748 = vand.u32 %v2747, 4294901760
        %2749 = vmatpush1.msra.mxu0 %v2748
        %v2750 = vand.u32 %v294, 4294901760
        %v2751 = vsub.f32 %v294, %v2750
        %v2752 = vand.u32 %v2751, 4294901760
        %2753 = vmatprep.subr.mxu0 %v2752
        %v2754 = vand.u32 %v293, 4294901760
        %v2755 = vsub.f32 %v293, %v2754
        %v2756 = vand.u32 %v2755, 4294901760
        %2757 = vmatpush1.msra.mxu0 %v2756
        %v2758 = vand.u32 %v296, 4294901760
        %v2759 = vsub.f32 %v296, %v2758
        %v2760 = vand.u32 %v2759, 4294901760
        %2761 = vmatprep.subr.mxu0 %v2760
        %v2762 = vand.u32 %v295, 4294901760
        %v2763 = vsub.f32 %v295, %v2762
        %v2764 = vand.u32 %v2763, 4294901760
        %2765 = vmatpush1.msra.mxu0 %v2764
        %v2766 = vand.u32 %v298, 4294901760
        %v2767 = vsub.f32 %v298, %v2766
        %v2768 = vand.u32 %v2767, 4294901760
        %2769 = vmatprep.subr.mxu0 %v2768
        %v2770 = vand.u32 %v297, 4294901760
        %v2771 = vsub.f32 %v297, %v2770
        %v2772 = vand.u32 %v2771, 4294901760
        %2773 = vmatpush1.msra.mxu0 %v2772
        %v2774 = vand.u32 %v300, 4294901760
        %v2775 = vsub.f32 %v300, %v2774
        %v2776 = vand.u32 %v2775, 4294901760
        %2777 = vmatprep.subr.mxu0 %v2776
        %v2778 = vand.u32 %v299, 4294901760
        %v2779 = vsub.f32 %v299, %v2778
        %v2780 = vand.u32 %v2779, 4294901760
        %2781 = vmatpush1.msra.mxu0 %v2780
        %v2782 = vand.u32 %v302, 4294901760
        %v2783 = vsub.f32 %v302, %v2782
        %v2784 = vand.u32 %v2783, 4294901760
        %2785 = vmatprep.subr.mxu0 %v2784
        %v2786 = vand.u32 %v301, 4294901760
        %v2787 = vsub.f32 %v301, %v2786
        %v2788 = vand.u32 %v2787, 4294901760
        %2789 = vmatpush1.msra.mxu0 %v2788
        %v2790 = vand.u32 %v221, 4294901760
        %2791 = vmatprep.mubr.f32.mxu0 %v2790
        %v2792 = vand.u32 %v214, 4294901760
        %2793 = vmatmul.mubr.f32.gmra.mrb[0].mxu0 %v2792
        %v2794 = vpop.f32.mrb[0].mxu0
        %v2795 = vadd.f32 %v2530, %v2794
        %v2796 = vpop.f32.mrb[0].mxu0
        %v2797 = vadd.f32 %v2532, %v2796
        %2798 = vdwg.mxu0
        %v2799 = vand.u32 %v240, 4294901760
        %2800 = vmatprep.subr.mxu0 %v2799
        %v2801 = vand.u32 %v239, 4294901760
        %2802 = vmatpush1.msra.mxu0 %v2801
        %v2803 = vand.u32 %v242, 4294901760
        %2804 = vmatprep.subr.mxu0 %v2803
        %v2805 = vand.u32 %v241, 4294901760
        %2806 = vmatpush1.msra.mxu0 %v2805
        %v2807 = vand.u32 %v244, 4294901760
        %2808 = vmatprep.subr.mxu0 %v2807
        %v2809 = vand.u32 %v243, 4294901760
        %2810 = vmatpush1.msra.mxu0 %v2809
        %v2811 = vand.u32 %v246, 4294901760
        %2812 = vmatprep.subr.mxu0 %v2811
        %v2813 = vand.u32 %v245, 4294901760
        %2814 = vmatpush1.msra.mxu0 %v2813
        %v2815 = vand.u32 %v248, 4294901760
        %2816 = vmatprep.subr.mxu0 %v2815
        %v2817 = vand.u32 %v247, 4294901760
        %2818 = vmatpush1.msra.mxu0 %v2817
        %v2819 = vand.u32 %v250, 4294901760
        %2820 = vmatprep.subr.mxu0 %v2819
        %v2821 = vand.u32 %v249, 4294901760
        %2822 = vmatpush1.msra.mxu0 %v2821
        %v2823 = vand.u32 %v252, 4294901760
        %2824 = vmatprep.subr.mxu0 %v2823
        %v2825 = vand.u32 %v251, 4294901760
        %2826 = vmatpush1.msra.mxu0 %v2825
        %v2827 = vand.u32 %v254, 4294901760
        %2828 = vmatprep.subr.mxu0 %v2827
        %v2829 = vand.u32 %v253, 4294901760
        %2830 = vmatpush1.msra.mxu0 %v2829
        %v2831 = vand.u32 %v256, 4294901760
        %2832 = vmatprep.subr.mxu0 %v2831
        %v2833 = vand.u32 %v255, 4294901760
        %2834 = vmatpush1.msra.mxu0 %v2833
        %v2835 = vand.u32 %v258, 4294901760
        %2836 = vmatprep.subr.mxu0 %v2835
        %v2837 = vand.u32 %v257, 4294901760
        %2838 = vmatpush1.msra.mxu0 %v2837
        %v2839 = vand.u32 %v260, 4294901760
        %2840 = vmatprep.subr.mxu0 %v2839
        %v2841 = vand.u32 %v259, 4294901760
        %2842 = vmatpush1.msra.mxu0 %v2841
        %v2843 = vand.u32 %v262, 4294901760
        %2844 = vmatprep.subr.mxu0 %v2843
        %v2845 = vand.u32 %v261, 4294901760
        %2846 = vmatpush1.msra.mxu0 %v2845
        %v2847 = vand.u32 %v264, 4294901760
        %2848 = vmatprep.subr.mxu0 %v2847
        %v2849 = vand.u32 %v263, 4294901760
        %2850 = vmatpush1.msra.mxu0 %v2849
        %v2851 = vand.u32 %v266, 4294901760
        %2852 = vmatprep.subr.mxu0 %v2851
        %v2853 = vand.u32 %v265, 4294901760
        %2854 = vmatpush1.msra.mxu0 %v2853
        %v2855 = vand.u32 %v268, 4294901760
        %2856 = vmatprep.subr.mxu0 %v2855
        %v2857 = vand.u32 %v267, 4294901760
        %2858 = vmatpush1.msra.mxu0 %v2857
        %v2859 = vand.u32 %v270, 4294901760
        %2860 = vmatprep.subr.mxu0 %v2859
        %v2861 = vand.u32 %v269, 4294901760
        %2862 = vmatpush1.msra.mxu0 %v2861
        %v2863 = vand.u32 %v272, 4294901760
        %2864 = vmatprep.subr.mxu0 %v2863
        %v2865 = vand.u32 %v271, 4294901760
        %2866 = vmatpush1.msra.mxu0 %v2865
        %v2867 = vand.u32 %v274, 4294901760
        %2868 = vmatprep.subr.mxu0 %v2867
        %v2869 = vand.u32 %v273, 4294901760
        %2870 = vmatpush1.msra.mxu0 %v2869
        %v2871 = vand.u32 %v276, 4294901760
        %2872 = vmatprep.subr.mxu0 %v2871
        %v2873 = vand.u32 %v275, 4294901760
        %2874 = vmatpush1.msra.mxu0 %v2873
        %v2875 = vand.u32 %v278, 4294901760
        %2876 = vmatprep.subr.mxu0 %v2875
        %v2877 = vand.u32 %v277, 4294901760
        %2878 = vmatpush1.msra.mxu0 %v2877
        %v2879 = vand.u32 %v280, 4294901760
        %2880 = vmatprep.subr.mxu0 %v2879
        %v2881 = vand.u32 %v279, 4294901760
        %2882 = vmatpush1.msra.mxu0 %v2881
        %v2883 = vand.u32 %v282, 4294901760
        %2884 = vmatprep.subr.mxu0 %v2883
        %v2885 = vand.u32 %v281, 4294901760
        %2886 = vmatpush1.msra.mxu0 %v2885
        %v2887 = vand.u32 %v284, 4294901760
        %2888 = vmatprep.subr.mxu0 %v2887
        %v2889 = vand.u32 %v283, 4294901760
        %2890 = vmatpush1.msra.mxu0 %v2889
        %v2891 = vand.u32 %v286, 4294901760
        %2892 = vmatprep.subr.mxu0 %v2891
        %v2893 = vand.u32 %v285, 4294901760
        %2894 = vmatpush1.msra.mxu0 %v2893
        %v2895 = vand.u32 %v288, 4294901760
        %2896 = vmatprep.subr.mxu0 %v2895
        %v2897 = vand.u32 %v287, 4294901760
        %2898 = vmatpush1.msra.mxu0 %v2897
        %v2899 = vand.u32 %v290, 4294901760
        %2900 = vmatprep.subr.mxu0 %v2899
        %v2901 = vand.u32 %v289, 4294901760
        %2902 = vmatpush1.msra.mxu0 %v2901
        %v2903 = vand.u32 %v292, 4294901760
        %2904 = vmatprep.subr.mxu0 %v2903
        %v2905 = vand.u32 %v291, 4294901760
        %2906 = vmatpush1.msra.mxu0 %v2905
        %v2907 = vand.u32 %v294, 4294901760
        %2908 = vmatprep.subr.mxu0 %v2907
        %v2909 = vand.u32 %v293, 4294901760
        %2910 = vmatpush1.msra.mxu0 %v2909
        %v2911 = vand.u32 %v296, 4294901760
        %2912 = vmatprep.subr.mxu0 %v2911
        %v2913 = vand.u32 %v295, 4294901760
        %2914 = vmatpush1.msra.mxu0 %v2913
        %v2915 = vand.u32 %v298, 4294901760
        %2916 = vmatprep.subr.mxu0 %v2915
        %v2917 = vand.u32 %v297, 4294901760
        %2918 = vmatpush1.msra.mxu0 %v2917
        %v2919 = vand.u32 %v300, 4294901760
        %2920 = vmatprep.subr.mxu0 %v2919
        %v2921 = vand.u32 %v299, 4294901760
        %2922 = vmatpush1.msra.mxu0 %v2921
        %v2923 = vand.u32 %v302, 4294901760
        %2924 = vmatprep.subr.mxu0 %v2923
        %v2925 = vand.u32 %v301, 4294901760
        %2926 = vmatpush1.msra.mxu0 %v2925
        %v2927 = vand.u32 %v221, 4294901760
        %2928 = vmatprep.mubr.f32.mxu0 %v2927
        %v2929 = vand.u32 %v214, 4294901760
        %2930 = vmatmul.mubr.f32.gmra.mrb[0].mxu0 %v2929
        %v2931 = vpop.f32.mrb[0].mxu0
        %v2932 = vadd.f32 %v2795, %v2931
        %v2933 = vpop.f32.mrb[0].mxu0
        %v2934 = vadd.f32 %v2797, %v2933
        %2935 = vdwg.mxu0
        %s2936 = sld [smem:[#allocation2]]
        %v2937 = vstv %s2936
        %v2938 = vadd.f32 %v2932, %v2937
        %v2939 = vadd.f32 %v2934, %v2937
        %v2940 = vmul.f32 %v2938, 0.5
        %v2941 = vmul.f32 %v2939, 0.5
        %v2942 = vtanh.pop %v2940
        %v2943 = vtanh.pop %v2941
        %v2944 = vadd.f32 %v2942, 1.0
        %v2945 = vadd.f32 %v2943, 1.0
        %v2946 = vmul.f32 %v2944, 0.5
        %v2947 = vmul.f32 %v2945, 0.5
        %v2948 = vlaneseq
        %v2949 = vshrl.u32 %v2948, 7
        %v2950 = vsub.s32 0, %v2949
        %v2951 = vrot.slane %v2946, %v2950
        %v2952 = vlaneseq
        %v2953 = vshrl.u32 %v2952, 7
        %v2954 = vsub.s32 0, %v2953
        %v2955 = vrot.slane %v2947, %v2954
        %v2958 = vcombine.low %v2951, %v2955
        %v2960 = vmul.f32 %v203, %v2958
        %2961 = vst [vmem:[%s202] sm:$0xff] %v2960
        %s2962 = sand.u32 %s98, 1
        %s2963 = scalar_lea.sflag [#allocation5], %s2962
        %s2964 = sand.u32 %s98, 1
        %s2965 = smul.addr %s2964, 8
        %s2966 = scalar_lea.vmem [#allocation8], %s2965
        // Predicated region
        $region41: #{tpu_custom_call.1} parent=31 // pred_check
          %p2967 = pneg %p108
        $region42: #{tpu_custom_call.1} parent=31 // pred_check_branch
          %2969 = sbr.rel (%p2967) target = $region44
        $region43: #{tpu_custom_call.1} parent=31 // pred_region
          %s2971 = ssub.s32 128, 128
          %2972 = vsyncadd %s2963, %s2971
          %s2973 = smul.addr %s22, 2
          %s2974 = smul.addr %s2973, 64
          %s2975 = scalar_lea.hbm %s3, %s2974
          %s2977 = sshll.u32 %s2966, 4
          %s2978 = int_to_ptr.vmem [resolvable:$true] %s2977
          %2980 = dma.vmem_to_hbm [thread:$0]  %s2978, 128, %s2975, %s2963
        $region44: #{tpu_custom_call.1} parent=31 // pred_fallthru
          _
      $region32: #{tpu_custom_call.1} parent=5 // pred_fallthru
        _
      %p2981 = scmp.le.s32.totalorder 2, %s17
      // Predicated region
      $region45: #{tpu_custom_call.1} parent=5 // pred_check
        %p2982 = pneg %p2981
      $region46: #{tpu_custom_call.1} parent=5 // pred_check_branch
        %2984 = sbr.rel (%p2982) target = $region48
      $region47: #{tpu_custom_call.1} parent=5 // pred_region
        %s2985 = ssub.s32 %s17, 2
        // Predicated region
        $region49: #{tpu_custom_call.1} parent=47 // pred_check
          %p2986 = pneg %p114
        $region50: #{tpu_custom_call.1} parent=47 // pred_check_branch
          %2988 = sbr.rel (%p2986) target = $region52
        $region51: #{tpu_custom_call.1} parent=47 // pred_region
          %s2989 = sand.u32 %s99, 1
          %s2990 = scalar_lea.sflag [#allocation5], %s2989
          %s2991 = sand.u32 %s99, 1
          %s2992 = smul.addr %s2991, 8
          %s2993 = scalar_lea.vmem [#allocation8], %s2992
          %2994 = dma.done %s2990, 128
        $region52: #{tpu_custom_call.1} parent=47 // pred_fallthru
          _
      $region48: #{tpu_custom_call.1} parent=5 // pred_fallthru
        _
    $region6: #{tpu_custom_call.1} parent=1 // loop_footer
      %s21 = sadd.s32 1, %s17
    $region7: #{tpu_custom_call.1} parent=1 // loop_footer_branch
      %16 = sbr.rel target = $region3
    $region8: #{tpu_custom_call.1} parent=1 // loop_exit
      _
    %2995 = vsyncpa [#allocation4], 1
    %s2996 = scalar_lea.sflag [#allocation4], 1
    %2997 = vsyncpa %s2996, 1
    %2998 = vsyncpa [#allocation7], 1
    %2999 = vsyncpa [#allocation5], 1
    %s3000 = scalar_lea.sflag [#allocation5], 1
    %3001 = vsyncpa %s3000, 1

</llo_original>
